<compile_context>
chip_gen: v5e
topology: v5e:2x2
jax: 0.10.0
libtpu: 0.0.40
codegen_flags: <defaults>
</compile_context>

<pallas_src>
import functools
import math

import jax
import jax.numpy as jnp
import numpy as np
from jax import lax
from jax.experimental import pallas as pl
from jax.experimental.pallas import tpu as pltpu


def _round_up(x, m):
    return ((x + m - 1) // m) * m


def _vmem_capacity_bytes():
    try:
        return int(pltpu.get_tpu_info().vmem_capacity_bytes)
    except Exception:
        return 128 * 1024 * 1024


def _pick_la_tile(La, cap):
    """Largest multiple-of-8 divisor of La that is <= cap (prefer big MXU LHS tiles)."""
    if La <= cap:
        return La
    for t in range(cap, 7, -8):
        if La % t == 0:
            return t
    # No clean divisor: fall back to a single full tile (correct, may be VMEM-heavy).
    return La


def _alignment_kernel(a_ref, b_ref, amask_col_ref, amask_row_ref,
                      bmask_col_ref, bmask_row_ref,
                      w1_ref, b1_ref, w2_ref, b2_ref,
                      a_feat_ref, b_feat_ref,
                      bproj_sc, m_sc, l_sc, *, temperature):
    # a_ref: (1, tLa, Dp) bf16   b_ref: (1, Lb, Dp) bf16
    # amask_col: (1, tLa, 1)  amask_row: (1, 1, 1, tLa)
    # bmask_col: (1, Lb, 1)   bmask_row: (1, 1, Lb)
    # w1/w2: (Dp, Hp) bf16    b1/b2: (1, Hp) f32
    # a_feat_ref: (1, Lb, Dp) f32 -- resident across the La axis (accumulator)
    # b_feat_ref: (1, tLa, Dp) f32
    ia = pl.program_id(1)
    n_ia = pl.num_programs(1)

    # ---- per-batch init: project b once, reset online-softmax state + output accumulator ----
    @pl.when(ia == 0)
    def _init():
        bproj = jnp.dot(b_ref[0], w2_ref[...],
                        preferred_element_type=jnp.float32) + b2_ref[...]
        bproj_sc[...] = jnp.maximum(bproj, 0.0).astype(jnp.bfloat16)
        # -inf running max is safe because masked scores are a finite -1e9.
        m_sc[...] = jnp.full(m_sc.shape, -jnp.inf, dtype=m_sc.dtype)
        l_sc[...] = jnp.zeros(l_sc.shape, dtype=l_sc.dtype)
        a_feat_ref[...] = jnp.zeros_like(a_feat_ref)

    a_bf = a_ref[0]                                            # (tLa, Dp) bf16
    aproj = jnp.dot(a_bf, w1_ref[...],
                    preferred_element_type=jnp.float32) + b1_ref[...]
    # fold temperature into a_proj (cheaper than scaling the (tLa, Lb) scores tile)
    aproj_bf = (jnp.maximum(aproj, 0.0) * temperature).astype(jnp.bfloat16)
    bproj_bf = bproj_sc[...]                                   # (Lb, Hp) bf16

    # ==== b_feature path: rows of this La tile are independent ====
    # scores[i, j] = <a_proj[i], b_proj[j]>                    -> (tLa, Lb)
    scores = lax.dot_general(aproj_bf, bproj_bf, (((1,), (1,)), ((), ())),
                             preferred_element_type=jnp.float32)
    mask = amask_col_ref[0] * bmask_row_ref[0]                 # (tLa,1)*(1,Lb)
    scores = jnp.where(mask > 0.0, scores, -1e9)
    m_row = jnp.max(scores, axis=1, keepdims=True)
    e_row = jnp.exp(scores - m_row)
    battn = e_row * pl.reciprocal(jnp.sum(e_row, axis=1, keepdims=True),
                                  approx=True)
    b_feat_ref[0] = jnp.dot(battn.astype(jnp.bfloat16), b_ref[0],
                            preferred_element_type=jnp.float32)

    # ==== a_feature path: online (flash-style) softmax across La tiles ====
    # scores_T[j, i] = <b_proj[j], a_proj[i]>                  -> (Lb, tLa)
    scores_t = lax.dot_general(bproj_bf, aproj_bf, (((1,), (1,)), ((), ())),
                               preferred_element_type=jnp.float32)
    mask_t = bmask_col_ref[0] * amask_row_ref[0, 0]            # (Lb,1)*(1,tLa)
    scores_t = jnp.where(mask_t > 0.0, scores_t, -1e9)

    m_new = jnp.maximum(m_sc[...], jnp.max(scores_t, axis=1, keepdims=True))
    alpha = jnp.exp(m_sc[...] - m_new)
    p = jnp.exp(scores_t - m_new)                              # (Lb, tLa)
    l_sc[...] = alpha * l_sc[...] + jnp.sum(p, axis=1, keepdims=True)
    # accumulate directly into the resident output block (no separate acc scratch)
    a_feat_ref[0] = alpha * a_feat_ref[0] + jnp.dot(
        p.astype(jnp.bfloat16), a_bf, preferred_element_type=jnp.float32)
    m_sc[...] = m_new

    @pl.when(ia == n_ia - 1)
    def _finalize():
        a_feat_ref[0] = a_feat_ref[0] * pl.reciprocal(l_sc[...], approx=True)


def alignment_forward(a_inputs, a_mask, b_inputs, b_mask,
                      w1, b1, w2, b2, temperature, *, la_tile=None,
                      single_buffer_invariants=True):
    B, La, D = a_inputs.shape
    _, Lb, _ = b_inputs.shape
    H = w1.shape[1]

    Dp = _round_up(D, 128)            # lane-dense feature dim (outputs / matmuls)
    Hp = _round_up(H, 128)            # lane-dense hidden dim

    vmem_cap = _vmem_capacity_bytes()
    la_cap = 512 if vmem_cap >= 96 * 1024 * 1024 else 256   # v5e/v6e vs v7x
    tLa = la_tile if la_tile is not None else _pick_la_tile(La, la_cap)
    if La % tLa != 0 or not (tLa == La or tLa % 8 == 0):
        raise ValueError(f"invalid La tile {tLa} for La={La}")
    nA = La // tLa

    f32, bf16 = jnp.float32, jnp.bfloat16

    # pad feature/hidden dims only when actually needed (padded columns contribute exactly 0)
    if Dp != D:
        a_p = jnp.pad(a_inputs, ((0, 0), (0, 0), (0, Dp - D))).astype(bf16)
        b_p = jnp.pad(b_inputs, ((0, 0), (0, 0), (0, Dp - D))).astype(bf16)
    else:
        a_p = a_inputs.astype(bf16)
        b_p = b_inputs.astype(bf16)
    if Dp != D or Hp != H:
        w1_p = jnp.pad(w1, ((0, Dp - D), (0, Hp - H))).astype(bf16)
        w2_p = jnp.pad(w2, ((0, Dp - D), (0, Hp - H))).astype(bf16)
    else:
        w1_p = w1.astype(bf16)
        w2_p = w2.astype(bf16)
    if Hp != H:
        b1_p = jnp.pad(b1.reshape(-1), (0, Hp - H)).reshape(1, Hp).astype(f32)
        b2_p = jnp.pad(b2.reshape(-1), (0, Hp - H)).reshape(1, Hp).astype(f32)
    else:
        b1_p = b1.reshape(1, Hp).astype(f32)
        b2_p = b2.reshape(1, Hp).astype(f32)

    amask_col = a_mask.astype(f32)                                 # (B, La, 1)
    amask_row = a_mask.astype(f32).reshape(B, nA, 1, tLa)          # per-tile lane-dense rows
    bmask_col = b_mask.astype(f32)                                 # (B, Lb, 1)
    bmask_row = jnp.transpose(b_mask.astype(f32), (0, 2, 1))       # (B, 1, Lb)

    kernel = functools.partial(_alignment_kernel, temperature=float(temperature))

    out_shape = (
        jax.ShapeDtypeStruct((B, Lb, Dp), f32),    # a_feature (padded)
        jax.ShapeDtypeStruct((B, La, Dp), f32),    # b_feature (padded)
    )

    # ---- per-step VMEM working-set estimate (conservative: invariants counted x2) ----
    est = (
        2 * 2 * tLa * Dp                                   # a tile (bf16, double-buffered)
        + 2 * 4 * (2 * tLa)                                # a-mask tiles
        + 2 * (2 * Lb * Dp + 2 * 2 * Dp * Hp + 2 * 4 * Hp + 2 * 4 * Lb)   # b, weights, biases, b-masks
        + 2 * 4 * Lb * Dp                                  # a_feature output (resident accumulator)
        + 2 * 4 * tLa * Dp                                 # b_feature output
        + 2 * Lb * Hp + 2 * 4 * Lb                         # bproj / m / l scratch
        + 4 * 8 * tLa * Lb + 6 * tLa * Hp + 4 * Lb * Hp    # live in-kernel f32/bf16 temporaries
    )
    floor = 32 * 1024 * 1024                               # never below the scoped-VMEM default
    cap_bytes = max(floor, int(vmem_cap * 0.85))           # ~56 MiB v7x, ~108 MiB v5e/v6e
    vmem_limit = max(floor, min(int(est * 1.5), cap_bytes))
    cp = pltpu.CompilerParams(dimension_semantics=("parallel", "arbitrary"),
                              vmem_limit_bytes=vmem_limit)

    def _call(single_buffer):
        def inv(shape, index_map):
            # loop-invariant-in-La operands: single revolving buffer saves VMEM, no DMA exposure
            if single_buffer:
                return pl.BlockSpec(shape, index_map, pipeline_mode=pl.Buffered(1))
            return pl.BlockSpec(shape, index_map)

        grid_spec = pltpu.PrefetchScalarGridSpec(
            num_scalar_prefetch=0,
            grid=(B, nA),
            in_specs=[
                pl.BlockSpec((1, tLa, Dp), lambda b, i: (b, i, 0)),       # a tile
                inv((1, Lb, Dp), lambda b, i: (b, 0, 0)),                 # full b (resident per batch)
                pl.BlockSpec((1, tLa, 1), lambda b, i: (b, i, 0)),        # a_mask column tile
                pl.BlockSpec((1, 1, 1, tLa), lambda b, i: (b, i, 0, 0)),  # a_mask row tile (lane-dense)
                inv((1, Lb, 1), lambda b, i: (b, 0, 0)),                  # b_mask column
                inv((1, 1, Lb), lambda b, i: (b, 0, 0)),                  # b_mask row (lane-dense)
                inv((Dp, Hp), lambda b, i: (0, 0)),                       # w1 (bf16)
                inv((1, Hp), lambda b, i: (0, 0)),                        # b1
                inv((Dp, Hp), lambda b, i: (0, 0)),                       # w2 (bf16)
                inv((1, Hp), lambda b, i: (0, 0)),                        # b2
            ],
            out_specs=[
                pl.BlockSpec((1, Lb, Dp), lambda b, i: (b, 0, 0)),        # a_feature (accum over i)
                pl.BlockSpec((1, tLa, Dp), lambda b, i: (b, i, 0)),       # b_feature
            ],
            scratch_shapes=[
                pltpu.VMEM((Lb, Hp), bf16),   # b projection (computed once per batch)
                pltpu.VMEM((Lb, 1), f32),     # running max  (column softmax)
                pltpu.VMEM((Lb, 1), f32),     # running sum
            ],
        )
        res = pl.pallas_call(
            kernel,
            out_shape=out_shape,
            grid_spec=grid_spec,
            compiler_params=cp,
        )(a_p, b_p, amask_col, amask_row, bmask_col, bmask_row,
          w1_p, b1_p, w2_p, b2_p)
        return jax.block_until_ready(res)

    if single_buffer_invariants:
        try:
            a_feat, b_feat = _call(True)
        except Exception:
            # backend rejected pipeline_mode=Buffered(1); fall back to default double-buffering
            a_feat, b_feat = _call(False)
    else:
        a_feat, b_feat = _call(False)

    if Dp != D:
        return a_feat[..., :D], b_feat[..., :D]
    return a_feat, b_feat


def alignment_reference(a_inputs, a_mask, b_inputs, b_mask,
                        w1, b1, w2, b2, temperature):
    a_proj = jax.nn.relu(jnp.einsum('bld,dh->blh', a_inputs, w1) + b1)
    b_proj = jax.nn.relu(jnp.einsum('bld,dh->blh', b_inputs, w2) + b2)
    scores = jnp.einsum('bih,bjh->bij', a_proj, b_proj) * temperature
    mask = jnp.einsum('bik,bjk->bij', a_mask, b_mask)
    scores = mask * scores + (1.0 - mask) * (-1e9)
    a_attn = jax.nn.softmax(scores, axis=1)
    b_attn = jax.nn.softmax(scores, axis=2)
    a_feature = jnp.einsum('bij,bid->bjd', a_attn, a_inputs)
    b_feature = jnp.einsum('bij,bjd->bid', b_attn, b_inputs)
    return a_feature, b_feature


if __name__ == "__main__":
    # Small shapes: batch=2, La=16, Lb=8, embedding_size=16, hidden_size=16.
    # la_tile=8 forces 2 La tiles so the flash-style accumulation path is exercised.
    B, La, Lb = 2, 16, 8
    E, H = 16, 16
    D = E + H                                   # linear in_features = E + H

    key = jax.random.PRNGKey(0)
    k1, k2, k3, k4, k5, k6 = jax.random.split(key, 6)

    a_inputs = jax.random.normal(k1, (B, La, D), dtype=jnp.float32)
    b_inputs = jax.random.normal(k2, (B, Lb, D), dtype=jnp.float32)

    # masks: 1 for valid positions, 0 for padding (includes fully-masked rows/cols)
    a_mask = jnp.ones((B, La, 1), dtype=jnp.float32).at[:, La - 2:, :].set(0.0)
    b_mask = jnp.ones((B, Lb, 1), dtype=jnp.float32).at[:, Lb - 1:, :].set(0.0)

    # nn.Linear init (weights pre-transposed to (D, H) so kernel computes x @ W + b)
    bound = 1.0 / math.sqrt(D)
    w1 = jax.random.uniform(k3, (D, H), jnp.float32, -bound, bound)
    b1 = jax.random.uniform(k4, (H,), jnp.float32, -bound, bound)
    w2 = jax.random.uniform(k5, (D, H), jnp.float32, -bound, bound)
    b2 = jax.random.uniform(k6, (H,), jnp.float32, -bound, bound)
    temperature = math.sqrt(1.0 / H)

    a_feat, b_feat = alignment_forward(a_inputs, a_mask, b_inputs, b_mask,
                                       w1, b1, w2, b2, temperature, la_tile=8)
    jax.block_until_ready((a_feat, b_feat))

    a_ref_out, b_ref_out = alignment_reference(a_inputs, a_mask, b_inputs, b_mask,
                                               w1, b1, w2, b2, temperature)
    # bf16 MXU operands + approx reciprocal => loosened tolerance vs the f32 reference
    np.testing.assert_allclose(np.asarray(a_feat), np.asarray(a_ref_out),
                               rtol=3e-2, atol=3e-2)
    np.testing.assert_allclose(np.asarray(b_feat), np.asarray(b_ref_out),
                               rtol=3e-2, atol=3e-2)

    print("KERNEL_OK")
</pallas_src>

<mosaic_0001>
module attributes {stable_mosaic.version = 11 : i64} {
  func.func @_alignment_kernel(%arg0: i32, %arg1: i32, %arg2: memref<1x8x128xbf16, #tpu.memory_space<vmem>>, %arg3: memref<1x8x128xbf16, #tpu.memory_space<vmem>>, %arg4: memref<1x8x1xf32, #tpu.memory_space<vmem>>, %arg5: memref<1x1x1x8xf32, #tpu.memory_space<vmem>>, %arg6: memref<1x8x1xf32, #tpu.memory_space<vmem>>, %arg7: memref<1x1x8xf32, #tpu.memory_space<vmem>>, %arg8: memref<128x128xbf16, #tpu.memory_space<vmem>>, %arg9: memref<1x128xf32, #tpu.memory_space<vmem>>, %arg10: memref<128x128xbf16, #tpu.memory_space<vmem>>, %arg11: memref<1x128xf32, #tpu.memory_space<vmem>>, %arg12: memref<1x8x128xf32, #tpu.memory_space<vmem>>, %arg13: memref<1x8x128xf32, #tpu.memory_space<vmem>>, %arg14: memref<8x128xbf16, #tpu.memory_space<vmem>>, %arg15: memref<8x1xf32, #tpu.memory_space<vmem>>, %arg16: memref<8x1xf32, #tpu.memory_space<vmem>>) attributes {dimension_semantics = [#tpu.dimension_semantics<parallel>, #tpu.dimension_semantics<arbitrary>], iteration_bounds = array<i64: 2, 2>, scalar_prefetch = 0 : i64, scratch_operands = 3 : i64, tpu.core_type = #tpu.core_type<tc>, window_params = [{transform_indices = @transform_0, window_bounds = array<i64: 1, 8, 128>}, {pipeline_mode = #tpu.pipeline_mode<synchronous>, transform_indices = @transform_1, window_bounds = array<i64: 1, 8, 128>}, {transform_indices = @transform_2, window_bounds = array<i64: 1, 8, 1>}, {transform_indices = @transform_3, window_bounds = array<i64: 1, 1, 1, 8>}, {pipeline_mode = #tpu.pipeline_mode<synchronous>, transform_indices = @transform_4, window_bounds = array<i64: 1, 8, 1>}, {pipeline_mode = #tpu.pipeline_mode<synchronous>, transform_indices = @transform_5, window_bounds = array<i64: 1, 1, 8>}, {pipeline_mode = #tpu.pipeline_mode<synchronous>, transform_indices = @transform_6, window_bounds = array<i64: 128, 128>}, {pipeline_mode = #tpu.pipeline_mode<synchronous>, transform_indices = @transform_7, window_bounds = array<i64: 1, 128>}, {pipeline_mode = #tpu.pipeline_mode<synchronous>, transform_indices = @transform_8, window_bounds = array<i64: 128, 128>}, {pipeline_mode = #tpu.pipeline_mode<synchronous>, transform_indices = @transform_9, window_bounds = array<i64: 1, 128>}, {transform_indices = @transform_10, window_bounds = array<i64: 1, 8, 128>}, {transform_indices = @transform_11, window_bounds = array<i64: 1, 8, 128>}]} {
    %c0_i32 = arith.constant 0 : i32
    %0 = arith.cmpi eq, %arg1, %c0_i32 : i32
    %1 = arith.extui %0 : i1 to i32
    %c0_i32_0 = arith.constant 0 : i32
    %2 = arith.cmpi ne, %1, %c0_i32_0 : i32
    scf.if %2 {
      %c0_59 = arith.constant 0 : index
      %c0_60 = arith.constant 0 : index
      %c0_61 = arith.constant 0 : index
      %87 = vector.load %arg3[%c0_59, %c0_60, %c0_61] : memref<1x8x128xbf16, #tpu.memory_space<vmem>>, vector<1x8x128xbf16>
      %88 = vector.shape_cast %87 : vector<1x8x128xbf16> to vector<8x128xbf16>
      %c0_62 = arith.constant 0 : index
      %c0_63 = arith.constant 0 : index
      %89 = vector.load %arg10[%c0_62, %c0_63] : memref<128x128xbf16, #tpu.memory_space<vmem>>, vector<128x128xbf16>
      %cst_64 = arith.constant dense<0.000000e+00> : vector<8x128xf32>
      %90 = tpu.matmul %88, %89, %cst_64 {dimension_numbers = #tpu.dot_dimension_numbers<[1], [0], [0], [1], [0, 0, 1, 1], [], []>} : vector<8x128xbf16>, vector<128x128xbf16>, vector<8x128xf32> -> vector<8x128xf32>
      %c0_65 = arith.constant 0 : index
      %c0_66 = arith.constant 0 : index
      %91 = vector.load %arg11[%c0_65, %c0_66] : memref<1x128xf32, #tpu.memory_space<vmem>>, vector<1x128xf32>
      %92 = vector.broadcast %91 : vector<1x128xf32> to vector<8x128xf32>
      %93 = arith.addf %90, %92 : vector<8x128xf32>
      %cst_67 = arith.constant 0.000000e+00 : f32
      %94 = vector.broadcast %cst_67 : f32 to vector<8x128xf32>
      %95 = arith.maximumf %93, %94 : vector<8x128xf32>
      %96 = arith.truncf %95 : vector<8x128xf32> to vector<8x128xbf16>
      %c0_68 = arith.constant 0 : index
      %c0_69 = arith.constant 0 : index
      %97 = vector.load %arg14[%c0_68, %c0_69] : memref<8x128xbf16, #tpu.memory_space<vmem>>, vector<8x128xbf16>
      tpu.vector_store %arg14[%c0_68, %c0_69], %96 {strides = array<i32>} : memref<8x128xbf16, #tpu.memory_space<vmem>>, vector<8x128xbf16>,
      %cst_70 = arith.constant 0xFF800000 : f32
      %98 = vector.broadcast %cst_70 : f32 to vector<8x1xf32>
      %c0_71 = arith.constant 0 : index
      %c0_72 = arith.constant 0 : index
      %99 = vector.load %arg15[%c0_71, %c0_72] : memref<8x1xf32, #tpu.memory_space<vmem>>, vector<8x1xf32>
      tpu.vector_store %arg15[%c0_71, %c0_72], %98 {strides = array<i32>} : memref<8x1xf32, #tpu.memory_space<vmem>>, vector<8x1xf32>,
      %cst_73 = arith.constant 0.000000e+00 : f32
      %100 = vector.broadcast %cst_73 : f32 to vector<8x1xf32>
      %c0_74 = arith.constant 0 : index
      %c0_75 = arith.constant 0 : index
      %101 = vector.load %arg16[%c0_74, %c0_75] : memref<8x1xf32, #tpu.memory_space<vmem>>, vector<8x1xf32>
      tpu.vector_store %arg16[%c0_74, %c0_75], %100 {strides = array<i32>} : memref<8x1xf32, #tpu.memory_space<vmem>>, vector<8x1xf32>,
      %cst_76 = arith.constant 0.000000e+00 : f32
      %102 = vector.broadcast %cst_76 : f32 to vector<1x8x128xf32>
      %c0_77 = arith.constant 0 : index
      %c0_78 = arith.constant 0 : index
      %c0_79 = arith.constant 0 : index
      %103 = vector.load %arg12[%c0_77, %c0_78, %c0_79] : memref<1x8x128xf32, #tpu.memory_space<vmem>>, vector<1x8x128xf32>
      tpu.vector_store %arg12[%c0_77, %c0_78, %c0_79], %102 {strides = array<i32>} : memref<1x8x128xf32, #tpu.memory_space<vmem>>, vector<1x8x128xf32>,
    } else {
    }
    %c0 = arith.constant 0 : index
    %c0_1 = arith.constant 0 : index
    %c0_2 = arith.constant 0 : index
    %3 = vector.load %arg2[%c0, %c0_1, %c0_2] : memref<1x8x128xbf16, #tpu.memory_space<vmem>>, vector<1x8x128xbf16>
    %4 = vector.shape_cast %3 : vector<1x8x128xbf16> to vector<8x128xbf16>
    %c0_3 = arith.constant 0 : index
    %c0_4 = arith.constant 0 : index
    %5 = vector.load %arg8[%c0_3, %c0_4] : memref<128x128xbf16, #tpu.memory_space<vmem>>, vector<128x128xbf16>
    %cst = arith.constant dense<0.000000e+00> : vector<8x128xf32>
    %6 = tpu.matmul %4, %5, %cst {dimension_numbers = #tpu.dot_dimension_numbers<[1], [0], [0], [1], [0, 0, 1, 1], [], []>} : vector<8x128xbf16>, vector<128x128xbf16>, vector<8x128xf32> -> vector<8x128xf32>
    %c0_5 = arith.constant 0 : index
    %c0_6 = arith.constant 0 : index
    %7 = vector.load %arg9[%c0_5, %c0_6] : memref<1x128xf32, #tpu.memory_space<vmem>>, vector<1x128xf32>
    %8 = vector.broadcast %7 : vector<1x128xf32> to vector<8x128xf32>
    %9 = arith.addf %6, %8 : vector<8x128xf32>
    %cst_7 = arith.constant 0.000000e+00 : f32
    %10 = vector.broadcast %cst_7 : f32 to vector<8x128xf32>
    %11 = arith.maximumf %9, %10 : vector<8x128xf32>
    %cst_8 = arith.constant 2.500000e-01 : f32
    %12 = vector.broadcast %cst_8 : f32 to vector<8x128xf32>
    %13 = arith.mulf %11, %12 : vector<8x128xf32>
    %14 = arith.truncf %13 : vector<8x128xf32> to vector<8x128xbf16>
    %c0_9 = arith.constant 0 : index
    %c0_10 = arith.constant 0 : index
    %15 = vector.load %arg14[%c0_9, %c0_10] : memref<8x128xbf16, #tpu.memory_space<vmem>>, vector<8x128xbf16>
    %cst_11 = arith.constant dense<0.000000e+00> : vector<8x8xf32>
    %16 = tpu.matmul %14, %15, %cst_11 {dimension_numbers = #tpu.dot_dimension_numbers<[1], [1], [0], [0], [0, 0, 1, 0], [], []>} : vector<8x128xbf16>, vector<8x128xbf16>, vector<8x8xf32> -> vector<8x8xf32>
    %c0_12 = arith.constant 0 : index
    %c0_13 = arith.constant 0 : index
    %c0_14 = arith.constant 0 : index
    %17 = vector.load %arg4[%c0_12, %c0_13, %c0_14] : memref<1x8x1xf32, #tpu.memory_space<vmem>>, vector<1x8x1xf32>
    %18 = vector.shape_cast %17 : vector<1x8x1xf32> to vector<8x1xf32>
    %c0_15 = arith.constant 0 : index
    %c0_16 = arith.constant 0 : index
    %c0_17 = arith.constant 0 : index
    %19 = vector.load %arg7[%c0_15, %c0_16, %c0_17] : memref<1x1x8xf32, #tpu.memory_space<vmem>>, vector<1x1x8xf32>
    %20 = vector.shape_cast %19 : vector<1x1x8xf32> to vector<1x8xf32>
    %21 = vector.broadcast %18 : vector<8x1xf32> to vector<8x8xf32>
    %22 = vector.broadcast %20 : vector<1x8xf32> to vector<8x8xf32>
    %23 = arith.mulf %21, %22 : vector<8x8xf32>
    %cst_18 = arith.constant 0.000000e+00 : f32
    %24 = vector.broadcast %cst_18 : f32 to vector<8x8xf32>
    %25 = arith.cmpf ogt, %23, %24 : vector<8x8xf32>
    %cst_19 = arith.constant -1.000000e+09 : f32
    %26 = vector.broadcast %cst_19 : f32 to vector<8x8xf32>
    %27 = arith.select %25, %16, %26 : vector<8x8xi1>, vector<8x8xf32>
    %cst_20 = arith.constant dense<0xFF800000> : vector<8xf32>
    %28 = vector.multi_reduction <maximumf>, %27, %cst_20 [1] : vector<8x8xf32> to vector<8xf32>
    %29 = vector.shape_cast %28 : vector<8xf32> to vector<8x1xf32>
    %30 = vector.broadcast %29 : vector<8x1xf32> to vector<8x8xf32>
    %31 = arith.subf %27, %30 : vector<8x8xf32>
    %32 = math.exp %31 : vector<8x8xf32>
    %cst_21 = arith.constant dense<0.000000e+00> : vector<8xf32>
    %33 = vector.multi_reduction <add>, %32, %cst_21 [1] : vector<8x8xf32> to vector<8xf32>
    %34 = vector.shape_cast %33 : vector<8xf32> to vector<8x1xf32>
    %35 = tpu.reciprocal %34 {approx = true} : vector<8x1xf32> -> vector<8x1xf32>
    %36 = vector.broadcast %35 : vector<8x1xf32> to vector<8x8xf32>
    %37 = arith.mulf %32, %36 : vector<8x8xf32>
    %38 = arith.truncf %37 : vector<8x8xf32> to vector<8x8xbf16>
    %c0_22 = arith.constant 0 : index
    %c0_23 = arith.constant 0 : index
    %c0_24 = arith.constant 0 : index
    %39 = vector.load %arg3[%c0_22, %c0_23, %c0_24] : memref<1x8x128xbf16, #tpu.memory_space<vmem>>, vector<1x8x128xbf16>
    %40 = vector.shape_cast %39 : vector<1x8x128xbf16> to vector<8x128xbf16>
    %cst_25 = arith.constant dense<0.000000e+00> : vector<8x128xf32>
    %41 = tpu.matmul %38, %40, %cst_25 {dimension_numbers = #tpu.dot_dimension_numbers<[1], [0], [0], [1], [0, 0, 1, 1], [], []>} : vector<8x8xbf16>, vector<8x128xbf16>, vector<8x128xf32> -> vector<8x128xf32>
    %c0_26 = arith.constant 0 : index
    %c0_27 = arith.constant 0 : index
    %c0_28 = arith.constant 0 : index
    %42 = vector.load %arg13[%c0_26, %c0_27, %c0_28] : memref<1x8x128xf32, #tpu.memory_space<vmem>>, vector<1x8x128xf32>
    %43 = vector.shape_cast %42 : vector<1x8x128xf32> to vector<8x128xf32>
    %44 = vector.shape_cast %41 : vector<8x128xf32> to vector<1x8x128xf32>
    tpu.vector_store %arg13[%c0_26, %c0_27, %c0_28], %44 {strides = array<i32>} : memref<1x8x128xf32, #tpu.memory_space<vmem>>, vector<1x8x128xf32>,
    %cst_29 = arith.constant dense<0.000000e+00> : vector<8x8xf32>
    %45 = tpu.matmul %15, %14, %cst_29 {dimension_numbers = #tpu.dot_dimension_numbers<[1], [1], [0], [0], [0, 0, 1, 0], [], []>} : vector<8x128xbf16>, vector<8x128xbf16>, vector<8x8xf32> -> vector<8x8xf32>
    %c0_30 = arith.constant 0 : index
    %c0_31 = arith.constant 0 : index
    %c0_32 = arith.constant 0 : index
    %46 = vector.load %arg6[%c0_30, %c0_31, %c0_32] : memref<1x8x1xf32, #tpu.memory_space<vmem>>, vector<1x8x1xf32>
    %47 = vector.shape_cast %46 : vector<1x8x1xf32> to vector<8x1xf32>
    %c0_33 = arith.constant 0 : index
    %c0_34 = arith.constant 0 : index
    %c0_35 = arith.constant 0 : index
    %c0_36 = arith.constant 0 : index
    %48 = vector.load %arg5[%c0_33, %c0_34, %c0_35, %c0_36] : memref<1x1x1x8xf32, #tpu.memory_space<vmem>>, vector<1x1x1x8xf32>
    %49 = vector.shape_cast %48 : vector<1x1x1x8xf32> to vector<1x8xf32>
    %50 = vector.broadcast %47 : vector<8x1xf32> to vector<8x8xf32>
    %51 = vector.broadcast %49 : vector<1x8xf32> to vector<8x8xf32>
    %52 = arith.mulf %50, %51 : vector<8x8xf32>
    %cst_37 = arith.constant 0.000000e+00 : f32
    %53 = vector.broadcast %cst_37 : f32 to vector<8x8xf32>
    %54 = arith.cmpf ogt, %52, %53 : vector<8x8xf32>
    %cst_38 = arith.constant -1.000000e+09 : f32
    %55 = vector.broadcast %cst_38 : f32 to vector<8x8xf32>
    %56 = arith.select %54, %45, %55 : vector<8x8xi1>, vector<8x8xf32>
    %c0_39 = arith.constant 0 : index
    %c0_40 = arith.constant 0 : index
    %57 = vector.load %arg15[%c0_39, %c0_40] : memref<8x1xf32, #tpu.memory_space<vmem>>, vector<8x1xf32>
    %cst_41 = arith.constant dense<0xFF800000> : vector<8xf32>
    %58 = vector.multi_reduction <maximumf>, %56, %cst_41 [1] : vector<8x8xf32> to vector<8xf32>
    %59 = vector.shape_cast %58 : vector<8xf32> to vector<8x1xf32>
    %60 = arith.maximumf %57, %59 : vector<8x1xf32>
    %c0_42 = arith.constant 0 : index
    %c0_43 = arith.constant 0 : index
    %61 = vector.load %arg15[%c0_42, %c0_43] : memref<8x1xf32, #tpu.memory_space<vmem>>, vector<8x1xf32>
    %62 = arith.subf %61, %60 : vector<8x1xf32>
    %63 = math.exp %62 : vector<8x1xf32>
    %64 = vector.broadcast %60 : vector<8x1xf32> to vector<8x8xf32>
    %65 = arith.subf %56, %64 : vector<8x8xf32>
    %66 = math.exp %65 : vector<8x8xf32>
    %c0_44 = arith.constant 0 : index
    %c0_45 = arith.constant 0 : index
    %67 = vector.load %arg16[%c0_44, %c0_45] : memref<8x1xf32, #tpu.memory_space<vmem>>, vector<8x1xf32>
    %68 = arith.mulf %63, %67 : vector<8x1xf32>
    %cst_46 = arith.constant dense<0.000000e+00> : vector<8xf32>
    %69 = vector.multi_reduction <add>, %66, %cst_46 [1] : vector<8x8xf32> to vector<8xf32>
    %70 = vector.shape_cast %69 : vector<8xf32> to vector<8x1xf32>
    %71 = arith.addf %68, %70 : vector<8x1xf32>
    %c0_47 = arith.constant 0 : index
    %c0_48 = arith.constant 0 : index
    %72 = vector.load %arg16[%c0_47, %c0_48] : memref<8x1xf32, #tpu.memory_space<vmem>>, vector<8x1xf32>
    tpu.vector_store %arg16[%c0_47, %c0_48], %71 {strides = array<i32>} : memref<8x1xf32, #tpu.memory_space<vmem>>, vector<8x1xf32>,
    %c0_49 = arith.constant 0 : index
    %c0_50 = arith.constant 0 : index
    %c0_51 = arith.constant 0 : index
    %73 = vector.load %arg12[%c0_49, %c0_50, %c0_51] : memref<1x8x128xf32, #tpu.memory_space<vmem>>, vector<1x8x128xf32>
    %74 = vector.shape_cast %73 : vector<1x8x128xf32> to vector<8x128xf32>
    %75 = vector.broadcast %63 : vector<8x1xf32> to vector<8x128xf32>
    %76 = arith.mulf %75, %74 : vector<8x128xf32>
    %77 = arith.truncf %66 : vector<8x8xf32> to vector<8x8xbf16>
    %cst_52 = arith.constant dense<0.000000e+00> : vector<8x128xf32>
    %78 = tpu.matmul %77, %4, %cst_52 {dimension_numbers = #tpu.dot_dimension_numbers<[1], [0], [0], [1], [0, 0, 1, 1], [], []>} : vector<8x8xbf16>, vector<8x128xbf16>, vector<8x128xf32> -> vector<8x128xf32>
    %79 = arith.addf %76, %78 : vector<8x128xf32>
    %c0_53 = arith.constant 0 : index
    %c0_54 = arith.constant 0 : index
    %c0_55 = arith.constant 0 : index
    %80 = vector.load %arg12[%c0_53, %c0_54, %c0_55] : memref<1x8x128xf32, #tpu.memory_space<vmem>>, vector<1x8x128xf32>
    %81 = vector.shape_cast %80 : vector<1x8x128xf32> to vector<8x128xf32>
    %82 = vector.shape_cast %79 : vector<8x128xf32> to vector<1x8x128xf32>
    tpu.vector_store %arg12[%c0_53, %c0_54, %c0_55], %82 {strides = array<i32>} : memref<1x8x128xf32, #tpu.memory_space<vmem>>, vector<1x8x128xf32>,
    %c0_56 = arith.constant 0 : index
    %c0_57 = arith.constant 0 : index
    %83 = vector.load %arg15[%c0_56, %c0_57] : memref<8x1xf32, #tpu.memory_space<vmem>>, vector<8x1xf32>
    tpu.vector_store %arg15[%c0_56, %c0_57], %60 {strides = array<i32>} : memref<8x1xf32, #tpu.memory_space<vmem>>, vector<8x1xf32>,
    %c1_i32 = arith.constant 1 : i32
    %84 = arith.cmpi eq, %arg1, %c1_i32 : i32
    %85 = arith.extui %84 : i1 to i32
    %c0_i32_58 = arith.constant 0 : i32
    %86 = arith.cmpi ne, %85, %c0_i32_58 : i32
    scf.if %86 {
      %c0_59 = arith.constant 0 : index
      %c0_60 = arith.constant 0 : index
      %c0_61 = arith.constant 0 : index
      %87 = vector.load %arg12[%c0_59, %c0_60, %c0_61] : memref<1x8x128xf32, #tpu.memory_space<vmem>>, vector<1x8x128xf32>
      %88 = vector.shape_cast %87 : vector<1x8x128xf32> to vector<8x128xf32>
      %c0_62 = arith.constant 0 : index
      %c0_63 = arith.constant 0 : index
      %89 = vector.load %arg16[%c0_62, %c0_63] : memref<8x1xf32, #tpu.memory_space<vmem>>, vector<8x1xf32>
      %90 = tpu.reciprocal %89 {approx = true} : vector<8x1xf32> -> vector<8x1xf32>
      %91 = vector.broadcast %90 : vector<8x1xf32> to vector<8x128xf32>
      %92 = arith.mulf %88, %91 : vector<8x128xf32>
      %c0_64 = arith.constant 0 : index
      %c0_65 = arith.constant 0 : index
      %c0_66 = arith.constant 0 : index
      %93 = vector.load %arg12[%c0_64, %c0_65, %c0_66] : memref<1x8x128xf32, #tpu.memory_space<vmem>>, vector<1x8x128xf32>
      %94 = vector.shape_cast %93 : vector<1x8x128xf32> to vector<8x128xf32>
      %95 = vector.shape_cast %92 : vector<8x128xf32> to vector<1x8x128xf32>
      tpu.vector_store %arg12[%c0_64, %c0_65, %c0_66], %95 {strides = array<i32>} : memref<1x8x128xf32, #tpu.memory_space<vmem>>, vector<1x8x128xf32>,
    } else {
    }
    return
  }
  func.func @transform_0(%arg0: i32, %arg1: i32) -> (i32, i32, i32) {
    %c0_i32 = arith.constant 0 : i32
    %c0_i32_0 = arith.constant 0 : i32
    return %arg0, %arg1, %c0_i32 : i32, i32, i32
  }
  func.func @transform_1(%arg0: i32, %arg1: i32) -> (i32, i32, i32) {
    %c0_i32 = arith.constant 0 : i32
    %c0_i32_0 = arith.constant 0 : i32
    %c0_i32_1 = arith.constant 0 : i32
    return %arg0, %c0_i32, %c0_i32_0 : i32, i32, i32
  }
  func.func @transform_2(%arg0: i32, %arg1: i32) -> (i32, i32, i32) {
    %c0_i32 = arith.constant 0 : i32
    %c0_i32_0 = arith.constant 0 : i32
    return %arg0, %arg1, %c0_i32 : i32, i32, i32
  }
  func.func @transform_3(%arg0: i32, %arg1: i32) -> (i32, i32, i32, i32) {
    %c0_i32 = arith.constant 0 : i32
    %c0_i32_0 = arith.constant 0 : i32
    %c0_i32_1 = arith.constant 0 : i32
    return %arg0, %arg1, %c0_i32, %c0_i32_0 : i32, i32, i32, i32
  }
  func.func @transform_4(%arg0: i32, %arg1: i32) -> (i32, i32, i32) {
    %c0_i32 = arith.constant 0 : i32
    %c0_i32_0 = arith.constant 0 : i32
    %c0_i32_1 = arith.constant 0 : i32
    return %arg0, %c0_i32, %c0_i32_0 : i32, i32, i32
  }
  func.func @transform_5(%arg0: i32, %arg1: i32) -> (i32, i32, i32) {
    %c0_i32 = arith.constant 0 : i32
    %c0_i32_0 = arith.constant 0 : i32
    %c0_i32_1 = arith.constant 0 : i32
    return %arg0, %c0_i32, %c0_i32_0 : i32, i32, i32
  }
  func.func @transform_6(%arg0: i32, %arg1: i32) -> (i32, i32) {
    %c0_i32 = arith.constant 0 : i32
    %c0_i32_0 = arith.constant 0 : i32
    %c0_i32_1 = arith.constant 0 : i32
    return %c0_i32, %c0_i32_0 : i32, i32
  }
  func.func @transform_7(%arg0: i32, %arg1: i32) -> (i32, i32) {
    %c0_i32 = arith.constant 0 : i32
    %c0_i32_0 = arith.constant 0 : i32
    %c0_i32_1 = arith.constant 0 : i32
    return %c0_i32, %c0_i32_0 : i32, i32
  }
  func.func @transform_8(%arg0: i32, %arg1: i32) -> (i32, i32) {
    %c0_i32 = arith.constant 0 : i32
    %c0_i32_0 = arith.constant 0 : i32
    %c0_i32_1 = arith.constant 0 : i32
    return %c0_i32, %c0_i32_0 : i32, i32
  }
  func.func @transform_9(%arg0: i32, %arg1: i32) -> (i32, i32) {
    %c0_i32 = arith.constant 0 : i32
    %c0_i32_0 = arith.constant 0 : i32
    %c0_i32_1 = arith.constant 0 : i32
    return %c0_i32, %c0_i32_0 : i32, i32
  }
  func.func @transform_10(%arg0: i32, %arg1: i32) -> (i32, i32, i32) {
    %c0_i32 = arith.constant 0 : i32
    %c0_i32_0 = arith.constant 0 : i32
    %c0_i32_1 = arith.constant 0 : i32
    return %arg0, %c0_i32, %c0_i32_0 : i32, i32, i32
  }
  func.func @transform_11(%arg0: i32, %arg1: i32) -> (i32, i32, i32) {
    %c0_i32 = arith.constant 0 : i32
    %c0_i32_0 = arith.constant 0 : i32
    return %arg0, %arg1, %c0_i32 : i32, i32, i32
  }
}

module attributes {stable_mosaic.version = 11 : i64} {
  func.func @_alignment_kernel(%arg0: i32, %arg1: i32, %arg2: memref<1x8x128xbf16, #tpu.memory_space<vmem>>, %arg3: memref<1x8x128xbf16, #tpu.memory_space<vmem>>, %arg4: memref<1x8x1xf32, #tpu.memory_space<vmem>>, %arg5: memref<1x1x1x8xf32, #tpu.memory_space<vmem>>, %arg6: memref<1x8x1xf32, #tpu.memory_space<vmem>>, %arg7: memref<1x1x8xf32, #tpu.memory_space<vmem>>, %arg8: memref<128x128xbf16, #tpu.memory_space<vmem>>, %arg9: memref<1x128xf32, #tpu.memory_space<vmem>>, %arg10: memref<128x128xbf16, #tpu.memory_space<vmem>>, %arg11: memref<1x128xf32, #tpu.memory_space<vmem>>, %arg12: memref<1x8x128xf32, #tpu.memory_space<vmem>>, %arg13: memref<1x8x128xf32, #tpu.memory_space<vmem>>, %arg14: memref<8x128xbf16, #tpu.memory_space<vmem>>, %arg15: memref<8x1xf32, #tpu.memory_space<vmem>>, %arg16: memref<8x1xf32, #tpu.memory_space<vmem>>) attributes {dimension_semantics = [#tpu.dimension_semantics<parallel>, #tpu.dimension_semantics<arbitrary>], iteration_bounds = array<i64: 2, 2>, scalar_prefetch = 0 : i64, scratch_operands = 3 : i64, tpu.core_type = #tpu.core_type<tc>, window_params = [{transform_indices = @transform_0, window_bounds = array<i64: 1, 8, 128>}, {transform_indices = @transform_1, window_bounds = array<i64: 1, 8, 128>}, {transform_indices = @transform_2, window_bounds = array<i64: 1, 8, 1>}, {transform_indices = @transform_3, window_bounds = array<i64: 1, 1, 1, 8>}, {transform_indices = @transform_4, window_bounds = array<i64: 1, 8, 1>}, {transform_indices = @transform_5, window_bounds = array<i64: 1, 1, 8>}, {pipeline_mode = #tpu.pipeline_mode<synchronous>, transform_indices = @transform_6, window_bounds = array<i64: 128, 128>}, {pipeline_mode = #tpu.pipeline_mode<synchronous>, transform_indices = @transform_7, window_bounds = array<i64: 1, 128>}, {pipeline_mode = #tpu.pipeline_mode<synchronous>, transform_indices = @transform_8, window_bounds = array<i64: 128, 128>}, {pipeline_mode = #tpu.pipeline_mode<synchronous>, transform_indices = @transform_9, window_bounds = array<i64: 1, 128>}, {transform_indices = @transform_10, window_bounds = array<i64: 1, 8, 128>}, {transform_indices = @transform_11, window_bounds = array<i64: 1, 8, 128>}]} {
    %c0_i32 = arith.constant 0 : i32
    %0 = arith.cmpi eq, %arg1, %c0_i32 : i32
    %1 = arith.extui %0 : i1 to i32
    %c0_i32_0 = arith.constant 0 : i32
    %2 = arith.cmpi ne, %1, %c0_i32_0 : i32
    scf.if %2 {
      %c0_59 = arith.constant 0 : index
      %c0_60 = arith.constant 0 : index
      %c0_61 = arith.constant 0 : index
      %87 = vector.load %arg3[%c0_59, %c0_60, %c0_61] : memref<1x8x128xbf16, #tpu.memory_space<vmem>>, vector<1x8x128xbf16>
      %88 = vector.shape_cast %87 : vector<1x8x128xbf16> to vector<8x128xbf16>
      %c0_62 = arith.constant 0 : index
      %c0_63 = arith.constant 0 : index
      %89 = vector.load %arg10[%c0_62, %c0_63] : memref<128x128xbf16, #tpu.memory_space<vmem>>, vector<128x128xbf16>
      %cst_64 = arith.constant dense<0.000000e+00> : vector<8x128xf32>
      %90 = tpu.matmul %88, %89, %cst_64 {dimension_numbers = #tpu.dot_dimension_numbers<[1], [0], [0], [1], [0, 0, 1, 1], [], []>} : vector<8x128xbf16>, vector<128x128xbf16>, vector<8x128xf32> -> vector<8x128xf32>
      %c0_65 = arith.constant 0 : index
      %c0_66 = arith.constant 0 : index
      %91 = vector.load %arg11[%c0_65, %c0_66] : memref<1x128xf32, #tpu.memory_space<vmem>>, vector<1x128xf32>
      %92 = vector.broadcast %91 : vector<1x128xf32> to vector<8x128xf32>
      %93 = arith.addf %90, %92 : vector<8x128xf32>
      %cst_67 = arith.constant 0.000000e+00 : f32
      %94 = vector.broadcast %cst_67 : f32 to vector<8x128xf32>
      %95 = arith.maximumf %93, %94 : vector<8x128xf32>
      %96 = arith.truncf %95 : vector<8x128xf32> to vector<8x128xbf16>
      %c0_68 = arith.constant 0 : index
      %c0_69 = arith.constant 0 : index
      %97 = vector.load %arg14[%c0_68, %c0_69] : memref<8x128xbf16, #tpu.memory_space<vmem>>, vector<8x128xbf16>
      tpu.vector_store %arg14[%c0_68, %c0_69], %96 {strides = array<i32>} : memref<8x128xbf16, #tpu.memory_space<vmem>>, vector<8x128xbf16>,
      %cst_70 = arith.constant 0xFF800000 : f32
      %98 = vector.broadcast %cst_70 : f32 to vector<8x1xf32>
      %c0_71 = arith.constant 0 : index
      %c0_72 = arith.constant 0 : index
      %99 = vector.load %arg15[%c0_71, %c0_72] : memref<8x1xf32, #tpu.memory_space<vmem>>, vector<8x1xf32>
      tpu.vector_store %arg15[%c0_71, %c0_72], %98 {strides = array<i32>} : memref<8x1xf32, #tpu.memory_space<vmem>>, vector<8x1xf32>,
      %cst_73 = arith.constant 0.000000e+00 : f32
      %100 = vector.broadcast %cst_73 : f32 to vector<8x1xf32>
      %c0_74 = arith.constant 0 : index
      %c0_75 = arith.constant 0 : index
      %101 = vector.load %arg16[%c0_74, %c0_75] : memref<8x1xf32, #tpu.memory_space<vmem>>, vector<8x1xf32>
      tpu.vector_store %arg16[%c0_74, %c0_75], %100 {strides = array<i32>} : memref<8x1xf32, #tpu.memory_space<vmem>>, vector<8x1xf32>,
      %cst_76 = arith.constant 0.000000e+00 : f32
      %102 = vector.broadcast %cst_76 : f32 to vector<1x8x128xf32>
      %c0_77 = arith.constant 0 : index
      %c0_78 = arith.constant 0 : index
      %c0_79 = arith.constant 0 : index
      %103 = vector.load %arg12[%c0_77, %c0_78, %c0_79] : memref<1x8x128xf32, #tpu.memory_space<vmem>>, vector<1x8x128xf32>
      tpu.vector_store %arg12[%c0_77, %c0_78, %c0_79], %102 {strides = array<i32>} : memref<1x8x128xf32, #tpu.memory_space<vmem>>, vector<1x8x128xf32>,
    } else {
    }
    %c0 = arith.constant 0 : index
    %c0_1 = arith.constant 0 : index
    %c0_2 = arith.constant 0 : index
    %3 = vector.load %arg2[%c0, %c0_1, %c0_2] : memref<1x8x128xbf16, #tpu.memory_space<vmem>>, vector<1x8x128xbf16>
    %4 = vector.shape_cast %3 : vector<1x8x128xbf16> to vector<8x128xbf16>
    %c0_3 = arith.constant 0 : index
    %c0_4 = arith.constant 0 : index
    %5 = vector.load %arg8[%c0_3, %c0_4] : memref<128x128xbf16, #tpu.memory_space<vmem>>, vector<128x128xbf16>
    %cst = arith.constant dense<0.000000e+00> : vector<8x128xf32>
    %6 = tpu.matmul %4, %5, %cst {dimension_numbers = #tpu.dot_dimension_numbers<[1], [0], [0], [1], [0, 0, 1, 1], [], []>} : vector<8x128xbf16>, vector<128x128xbf16>, vector<8x128xf32> -> vector<8x128xf32>
    %c0_5 = arith.constant 0 : index
    %c0_6 = arith.constant 0 : index
    %7 = vector.load %arg9[%c0_5, %c0_6] : memref<1x128xf32, #tpu.memory_space<vmem>>, vector<1x128xf32>
    %8 = vector.broadcast %7 : vector<1x128xf32> to vector<8x128xf32>
    %9 = arith.addf %6, %8 : vector<8x128xf32>
    %cst_7 = arith.constant 0.000000e+00 : f32
    %10 = vector.broadcast %cst_7 : f32 to vector<8x128xf32>
    %11 = arith.maximumf %9, %10 : vector<8x128xf32>
    %cst_8 = arith.constant 2.500000e-01 : f32
    %12 = vector.broadcast %cst_8 : f32 to vector<8x128xf32>
    %13 = arith.mulf %11, %12 : vector<8x128xf32>
    %14 = arith.truncf %13 : vector<8x128xf32> to vector<8x128xbf16>
    %c0_9 = arith.constant 0 : index
    %c0_10 = arith.constant 0 : index
    %15 = vector.load %arg14[%c0_9, %c0_10] : memref<8x128xbf16, #tpu.memory_space<vmem>>, vector<8x128xbf16>
    %cst_11 = arith.constant dense<0.000000e+00> : vector<8x8xf32>
    %16 = tpu.matmul %14, %15, %cst_11 {dimension_numbers = #tpu.dot_dimension_numbers<[1], [1], [0], [0], [0, 0, 1, 0], [], []>} : vector<8x128xbf16>, vector<8x128xbf16>, vector<8x8xf32> -> vector<8x8xf32>
    %c0_12 = arith.constant 0 : index
    %c0_13 = arith.constant 0 : index
    %c0_14 = arith.constant 0 : index
    %17 = vector.load %arg4[%c0_12, %c0_13, %c0_14] : memref<1x8x1xf32, #tpu.memory_space<vmem>>, vector<1x8x1xf32>
    %18 = vector.shape_cast %17 : vector<1x8x1xf32> to vector<8x1xf32>
    %c0_15 = arith.constant 0 : index
    %c0_16 = arith.constant 0 : index
    %c0_17 = arith.constant 0 : index
    %19 = vector.load %arg7[%c0_15, %c0_16, %c0_17] : memref<1x1x8xf32, #tpu.memory_space<vmem>>, vector<1x1x8xf32>
    %20 = vector.shape_cast %19 : vector<1x1x8xf32> to vector<1x8xf32>
    %21 = vector.broadcast %18 : vector<8x1xf32> to vector<8x8xf32>
    %22 = vector.broadcast %20 : vector<1x8xf32> to vector<8x8xf32>
    %23 = arith.mulf %21, %22 : vector<8x8xf32>
    %cst_18 = arith.constant 0.000000e+00 : f32
    %24 = vector.broadcast %cst_18 : f32 to vector<8x8xf32>
    %25 = arith.cmpf ogt, %23, %24 : vector<8x8xf32>
    %cst_19 = arith.constant -1.000000e+09 : f32
    %26 = vector.broadcast %cst_19 : f32 to vector<8x8xf32>
    %27 = arith.select %25, %16, %26 : vector<8x8xi1>, vector<8x8xf32>
    %cst_20 = arith.constant dense<0xFF800000> : vector<8xf32>
    %28 = vector.multi_reduction <maximumf>, %27, %cst_20 [1] : vector<8x8xf32> to vector<8xf32>
    %29 = vector.shape_cast %28 : vector<8xf32> to vector<8x1xf32>
    %30 = vector.broadcast %29 : vector<8x1xf32> to vector<8x8xf32>
    %31 = arith.subf %27, %30 : vector<8x8xf32>
    %32 = math.exp %31 : vector<8x8xf32>
    %cst_21 = arith.constant dense<0.000000e+00> : vector<8xf32>
    %33 = vector.multi_reduction <add>, %32, %cst_21 [1] : vector<8x8xf32> to vector<8xf32>
    %34 = vector.shape_cast %33 : vector<8xf32> to vector<8x1xf32>
    %35 = tpu.reciprocal %34 {approx = true} : vector<8x1xf32> -> vector<8x1xf32>
    %36 = vector.broadcast %35 : vector<8x1xf32> to vector<8x8xf32>
    %37 = arith.mulf %32, %36 : vector<8x8xf32>
    %38 = arith.truncf %37 : vector<8x8xf32> to vector<8x8xbf16>
    %c0_22 = arith.constant 0 : index
    %c0_23 = arith.constant 0 : index
    %c0_24 = arith.constant 0 : index
    %39 = vector.load %arg3[%c0_22, %c0_23, %c0_24] : memref<1x8x128xbf16, #tpu.memory_space<vmem>>, vector<1x8x128xbf16>
    %40 = vector.shape_cast %39 : vector<1x8x128xbf16> to vector<8x128xbf16>
    %cst_25 = arith.constant dense<0.000000e+00> : vector<8x128xf32>
    %41 = tpu.matmul %38, %40, %cst_25 {dimension_numbers = #tpu.dot_dimension_numbers<[1], [0], [0], [1], [0, 0, 1, 1], [], []>} : vector<8x8xbf16>, vector<8x128xbf16>, vector<8x128xf32> -> vector<8x128xf32>
    %c0_26 = arith.constant 0 : index
    %c0_27 = arith.constant 0 : index
    %c0_28 = arith.constant 0 : index
    %42 = vector.load %arg13[%c0_26, %c0_27, %c0_28] : memref<1x8x128xf32, #tpu.memory_space<vmem>>, vector<1x8x128xf32>
    %43 = vector.shape_cast %42 : vector<1x8x128xf32> to vector<8x128xf32>
    %44 = vector.shape_cast %41 : vector<8x128xf32> to vector<1x8x128xf32>
    tpu.vector_store %arg13[%c0_26, %c0_27, %c0_28], %44 {strides = array<i32>} : memref<1x8x128xf32, #tpu.memory_space<vmem>>, vector<1x8x128xf32>,
    %cst_29 = arith.constant dense<0.000000e+00> : vector<8x8xf32>
    %45 = tpu.matmul %15, %14, %cst_29 {dimension_numbers = #tpu.dot_dimension_numbers<[1], [1], [0], [0], [0, 0, 1, 0], [], []>} : vector<8x128xbf16>, vector<8x128xbf16>, vector<8x8xf32> -> vector<8x8xf32>
    %c0_30 = arith.constant 0 : index
    %c0_31 = arith.constant 0 : index
    %c0_32 = arith.constant 0 : index
    %46 = vector.load %arg6[%c0_30, %c0_31, %c0_32] : memref<1x8x1xf32, #tpu.memory_space<vmem>>, vector<1x8x1xf32>
    %47 = vector.shape_cast %46 : vector<1x8x1xf32> to vector<8x1xf32>
    %c0_33 = arith.constant 0 : index
    %c0_34 = arith.constant 0 : index
    %c0_35 = arith.constant 0 : index
    %c0_36 = arith.constant 0 : index
    %48 = vector.load %arg5[%c0_33, %c0_34, %c0_35, %c0_36] : memref<1x1x1x8xf32, #tpu.memory_space<vmem>>, vector<1x1x1x8xf32>
    %49 = vector.shape_cast %48 : vector<1x1x1x8xf32> to vector<1x8xf32>
    %50 = vector.broadcast %47 : vector<8x1xf32> to vector<8x8xf32>
    %51 = vector.broadcast %49 : vector<1x8xf32> to vector<8x8xf32>
    %52 = arith.mulf %50, %51 : vector<8x8xf32>
    %cst_37 = arith.constant 0.000000e+00 : f32
    %53 = vector.broadcast %cst_37 : f32 to vector<8x8xf32>
    %54 = arith.cmpf ogt, %52, %53 : vector<8x8xf32>
    %cst_38 = arith.constant -1.000000e+09 : f32
    %55 = vector.broadcast %cst_38 : f32 to vector<8x8xf32>
    %56 = arith.select %54, %45, %55 : vector<8x8xi1>, vector<8x8xf32>
    %c0_39 = arith.constant 0 : index
    %c0_40 = arith.constant 0 : index
    %57 = vector.load %arg15[%c0_39, %c0_40] : memref<8x1xf32, #tpu.memory_space<vmem>>, vector<8x1xf32>
    %cst_41 = arith.constant dense<0xFF800000> : vector<8xf32>
    %58 = vector.multi_reduction <maximumf>, %56, %cst_41 [1] : vector<8x8xf32> to vector<8xf32>
    %59 = vector.shape_cast %58 : vector<8xf32> to vector<8x1xf32>
    %60 = arith.maximumf %57, %59 : vector<8x1xf32>
    %c0_42 = arith.constant 0 : index
    %c0_43 = arith.constant 0 : index
    %61 = vector.load %arg15[%c0_42, %c0_43] : memref<8x1xf32, #tpu.memory_space<vmem>>, vector<8x1xf32>
    %62 = arith.subf %61, %60 : vector<8x1xf32>
    %63 = math.exp %62 : vector<8x1xf32>
    %64 = vector.broadcast %60 : vector<8x1xf32> to vector<8x8xf32>
    %65 = arith.subf %56, %64 : vector<8x8xf32>
    %66 = math.exp %65 : vector<8x8xf32>
    %c0_44 = arith.constant 0 : index
    %c0_45 = arith.constant 0 : index
    %67 = vector.load %arg16[%c0_44, %c0_45] : memref<8x1xf32, #tpu.memory_space<vmem>>, vector<8x1xf32>
    %68 = arith.mulf %63, %67 : vector<8x1xf32>
    %cst_46 = arith.constant dense<0.000000e+00> : vector<8xf32>
    %69 = vector.multi_reduction <add>, %66, %cst_46 [1] : vector<8x8xf32> to vector<8xf32>
    %70 = vector.shape_cast %69 : vector<8xf32> to vector<8x1xf32>
    %71 = arith.addf %68, %70 : vector<8x1xf32>
    %c0_47 = arith.constant 0 : index
    %c0_48 = arith.constant 0 : index
    %72 = vector.load %arg16[%c0_47, %c0_48] : memref<8x1xf32, #tpu.memory_space<vmem>>, vector<8x1xf32>
    tpu.vector_store %arg16[%c0_47, %c0_48], %71 {strides = array<i32>} : memref<8x1xf32, #tpu.memory_space<vmem>>, vector<8x1xf32>,
    %c0_49 = arith.constant 0 : index
    %c0_50 = arith.constant 0 : index
    %c0_51 = arith.constant 0 : index
    %73 = vector.load %arg12[%c0_49, %c0_50, %c0_51] : memref<1x8x128xf32, #tpu.memory_space<vmem>>, vector<1x8x128xf32>
    %74 = vector.shape_cast %73 : vector<1x8x128xf32> to vector<8x128xf32>
    %75 = vector.broadcast %63 : vector<8x1xf32> to vector<8x128xf32>
    %76 = arith.mulf %75, %74 : vector<8x128xf32>
    %77 = arith.truncf %66 : vector<8x8xf32> to vector<8x8xbf16>
    %cst_52 = arith.constant dense<0.000000e+00> : vector<8x128xf32>
    %78 = tpu.matmul %77, %4, %cst_52 {dimension_numbers = #tpu.dot_dimension_numbers<[1], [0], [0], [1], [0, 0, 1, 1], [], []>} : vector<8x8xbf16>, vector<8x128xbf16>, vector<8x128xf32> -> vector<8x128xf32>
    %79 = arith.addf %76, %78 : vector<8x128xf32>
    %c0_53 = arith.constant 0 : index
    %c0_54 = arith.constant 0 : index
    %c0_55 = arith.constant 0 : index
    %80 = vector.load %arg12[%c0_53, %c0_54, %c0_55] : memref<1x8x128xf32, #tpu.memory_space<vmem>>, vector<1x8x128xf32>
    %81 = vector.shape_cast %80 : vector<1x8x128xf32> to vector<8x128xf32>
    %82 = vector.shape_cast %79 : vector<8x128xf32> to vector<1x8x128xf32>
    tpu.vector_store %arg12[%c0_53, %c0_54, %c0_55], %82 {strides = array<i32>} : memref<1x8x128xf32, #tpu.memory_space<vmem>>, vector<1x8x128xf32>,
    %c0_56 = arith.constant 0 : index
    %c0_57 = arith.constant 0 : index
    %83 = vector.load %arg15[%c0_56, %c0_57] : memref<8x1xf32, #tpu.memory_space<vmem>>, vector<8x1xf32>
    tpu.vector_store %arg15[%c0_56, %c0_57], %60 {strides = array<i32>} : memref<8x1xf32, #tpu.memory_space<vmem>>, vector<8x1xf32>,
    %c1_i32 = arith.constant 1 : i32
    %84 = arith.cmpi eq, %arg1, %c1_i32 : i32
    %85 = arith.extui %84 : i1 to i32
    %c0_i32_58 = arith.constant 0 : i32
    %86 = arith.cmpi ne, %85, %c0_i32_58 : i32
    scf.if %86 {
      %c0_59 = arith.constant 0 : index
      %c0_60 = arith.constant 0 : index
      %c0_61 = arith.constant 0 : index
      %87 = vector.load %arg12[%c0_59, %c0_60, %c0_61] : memref<1x8x128xf32, #tpu.memory_space<vmem>>, vector<1x8x128xf32>
      %88 = vector.shape_cast %87 : vector<1x8x128xf32> to vector<8x128xf32>
      %c0_62 = arith.constant 0 : index
      %c0_63 = arith.constant 0 : index
      %89 = vector.load %arg16[%c0_62, %c0_63] : memref<8x1xf32, #tpu.memory_space<vmem>>, vector<8x1xf32>
      %90 = tpu.reciprocal %89 {approx = true} : vector<8x1xf32> -> vector<8x1xf32>
      %91 = vector.broadcast %90 : vector<8x1xf32> to vector<8x128xf32>
      %92 = arith.mulf %88, %91 : vector<8x128xf32>
      %c0_64 = arith.constant 0 : index
      %c0_65 = arith.constant 0 : index
      %c0_66 = arith.constant 0 : index
      %93 = vector.load %arg12[%c0_64, %c0_65, %c0_66] : memref<1x8x128xf32, #tpu.memory_space<vmem>>, vector<1x8x128xf32>
      %94 = vector.shape_cast %93 : vector<1x8x128xf32> to vector<8x128xf32>
      %95 = vector.shape_cast %92 : vector<8x128xf32> to vector<1x8x128xf32>
      tpu.vector_store %arg12[%c0_64, %c0_65, %c0_66], %95 {strides = array<i32>} : memref<1x8x128xf32, #tpu.memory_space<vmem>>, vector<1x8x128xf32>,
    } else {
    }
    return
  }
  func.func @transform_0(%arg0: i32, %arg1: i32) -> (i32, i32, i32) {
    %c0_i32 = arith.constant 0 : i32
    %c0_i32_0 = arith.constant 0 : i32
    return %arg0, %arg1, %c0_i32 : i32, i32, i32
  }
  func.func @transform_1(%arg0: i32, %arg1: i32) -> (i32, i32, i32) {
    %c0_i32 = arith.constant 0 : i32
    %c0_i32_0 = arith.constant 0 : i32
    %c0_i32_1 = arith.constant 0 : i32
    return %arg0, %c0_i32, %c0_i32_0 : i32, i32, i32
  }
  func.func @transform_2(%arg0: i32, %arg1: i32) -> (i32, i32, i32) {
    %c0_i32 = arith.constant 0 : i32
    %c0_i32_0 = arith.constant 0 : i32
    return %arg0, %arg1, %c0_i32 : i32, i32, i32
  }
  func.func @transform_3(%arg0: i32, %arg1: i32) -> (i32, i32, i32, i32) {
    %c0_i32 = arith.constant 0 : i32
    %c0_i32_0 = arith.constant 0 : i32
    %c0_i32_1 = arith.constant 0 : i32
    return %arg0, %arg1, %c0_i32, %c0_i32_0 : i32, i32, i32, i32
  }
  func.func @transform_4(%arg0: i32, %arg1: i32) -> (i32, i32, i32) {
    %c0_i32 = arith.constant 0 : i32
    %c0_i32_0 = arith.constant 0 : i32
    %c0_i32_1 = arith.constant 0 : i32
    return %arg0, %c0_i32, %c0_i32_0 : i32, i32, i32
  }
  func.func @transform_5(%arg0: i32, %arg1: i32) -> (i32, i32, i32) {
    %c0_i32 = arith.constant 0 : i32
    %c0_i32_0 = arith.constant 0 : i32
    %c0_i32_1 = arith.constant 0 : i32
    return %arg0, %c0_i32, %c0_i32_0 : i32, i32, i32
  }
  func.func @transform_6(%arg0: i32, %arg1: i32) -> (i32, i32) {
    %c0_i32 = arith.constant 0 : i32
    %c0_i32_0 = arith.constant 0 : i32
    %c0_i32_1 = arith.constant 0 : i32
    return %c0_i32, %c0_i32_0 : i32, i32
  }
  func.func @transform_7(%arg0: i32, %arg1: i32) -> (i32, i32) {
    %c0_i32 = arith.constant 0 : i32
    %c0_i32_0 = arith.constant 0 : i32
    %c0_i32_1 = arith.constant 0 : i32
    return %c0_i32, %c0_i32_0 : i32, i32
  }
  func.func @transform_8(%arg0: i32, %arg1: i32) -> (i32, i32) {
    %c0_i32 = arith.constant 0 : i32
    %c0_i32_0 = arith.constant 0 : i32
    %c0_i32_1 = arith.constant 0 : i32
    return %c0_i32, %c0_i32_0 : i32, i32
  }
  func.func @transform_9(%arg0: i32, %arg1: i32) -> (i32, i32) {
    %c0_i32 = arith.constant 0 : i32
    %c0_i32_0 = arith.constant 0 : i32
    %c0_i32_1 = arith.constant 0 : i32
    return %c0_i32, %c0_i32_0 : i32, i32
  }
  func.func @transform_10(%arg0: i32, %arg1: i32) -> (i32, i32, i32) {
    %c0_i32 = arith.constant 0 : i32
    %c0_i32_0 = arith.constant 0 : i32
    %c0_i32_1 = arith.constant 0 : i32
    return %arg0, %c0_i32, %c0_i32_0 : i32, i32, i32
  }
  func.func @transform_11(%arg0: i32, %arg1: i32) -> (i32, i32, i32) {
    %c0_i32 = arith.constant 0 : i32
    %c0_i32_0 = arith.constant 0 : i32
    return %arg0, %arg1, %c0_i32 : i32, i32, i32
  }
}

</mosaic_0001>

<llo_original>
// kernel: tpu_custom_call.1
$region0: #{tpu_custom_call.1}
  #allocation0 [shape = 'u32[]', space=smem, size = 0x4, offset = 0x4, fixed_abs, tag = 'smem constant byte address 0x4 - core index']
  #allocation1 [shape = 'u32[72,128]{1,0:T(1,128)}', space=vmem, size = 0x9000, scoped, tag = 'internal scratch']
  #allocation2 [shape = 'bf16[8,128]{1,0:T(8,128)(2,1)}', space=vmem, size = 0x800, scoped, tag = 'scratch operand']
  #allocation3 [shape = 'f32[8,1]{1,0:T(8,128)}', space=vmem, size = 0x1000, scoped, tag = 'scratch operand']
  #allocation4 [shape = 'f32[8,1]{1,0:T(8,128)}', space=vmem, size = 0x1000, scoped, tag = 'scratch operand']
  %s0 = inlined_call_operand.vmem [shape: bf16[2,16,128], index: 0, kind: input, shape index: {}]
  %s1 = inlined_call_operand.vmem [shape: bf16[2,8,128], index: 1, kind: input, shape index: {}]
  %s2 = inlined_call_operand.vmem [shape: f32[2,16,1], index: 2, kind: input, shape index: {}]
  %s3 = inlined_call_operand.vmem [shape: f32[2,2,1,8], index: 3, kind: input, shape index: {}]
  %s4 = inlined_call_operand.vmem [shape: f32[2,8,1], index: 4, kind: input, shape index: {}]
  %s5 = inlined_call_operand.vmem [shape: f32[2,1,8], index: 5, kind: input, shape index: {}]
  %s6 = inlined_call_operand.hbm [shape: bf16[128,128], index: 6, kind: input, shape index: {}]
  %s7 = inlined_call_operand.vmem [shape: f32[1,128], index: 7, kind: input, shape index: {}]
  %s8 = inlined_call_operand.hbm [shape: bf16[128,128], index: 8, kind: input, shape index: {}]
  %s9 = inlined_call_operand.vmem [shape: f32[1,128], index: 9, kind: input, shape index: {}]
  %s10 = inlined_call_operand.hbm [shape: f32[2,8,128], index: 10, kind: output, shape index: {0}]
  %s11 = inlined_call_operand.hbm [shape: f32[2,16,128], index: 11, kind: output, shape index: {1}]
  %12 = xla_tuple %s10, %s11
  %s13 = sld [smem:[#allocation0]]
  $region97: #{tpu_custom_call.1} parent=0
    _
  %s15 = ssub.s32 1, %s13
  %s16 = scalar_select 0, %s15, %s13
  $region1: #{tpu_custom_call.1} parent=0
    #allocation5 [shape = 'u8[32768]{0}', space=vmem, size = 0x8000, scoped, tag = 'input window, operand 6, single buffered']
    #allocation6 [shape = 's32[2]{0}', space=sflag, size = 0x8, scoped, tag = 'scoped memory for tpu_custom_call.1']
    #allocation7 [shape = 's32[2]{0}', space=sflag, size = 0x8, scoped, tag = 'scoped memory for tpu_custom_call.1']
    #allocation8 [shape = 'u8[32768]{0}', space=vmem, size = 0x8000, scoped, tag = 'input window, operand 8, single buffered']
    #allocation9 [shape = 's32[1]{0}', space=sflag, size = 0x4, scoped, tag = 'scoped memory for tpu_custom_call.1']
    #allocation10 [shape = 'u8[8192]{0}', space=vmem, size = 0x2000, scoped, tag = 'output window, operand 0']
    #allocation11 [shape = 'u8[8192]{0}', space=vmem, size = 0x2000, scoped, tag = 'output window, operand 1']
    #allocation12 [shape = 's32[2]{0}', space=sflag, size = 0x8, scoped, tag = 'scoped memory for tpu_custom_call.1']
    %17 = vsyncpa [#allocation6], 0
    %18 = vsyncpa [#allocation9], 0
    %19 = vsyncpa [#allocation7], 0
    %s20 = scalar_lea.sflag [#allocation7], 1
    %21 = vsyncpa %s20, 0
    %22 = vsyncpa [#allocation12], 0
    %s23 = scalar_lea.sflag [#allocation12], 1
    %24 = vsyncpa %s23, 0
    loop: start=0, step=1, limit=6
    $region2: #{tpu_custom_call.1} parent=1 // loop_pre_header
      _
    $region3: #{tpu_custom_call.1} parent=1 // loop_header
      %s26 = sphi 0, %s30
      %p27 = scmp.ge.s32.totalorder %s26, 6
      %s33 = sphi 0, %s45
      %s34 = sphi 0, %s41
      %s35 = sphi 0, %s33
      %s36 = sphi 0, %s34
      %s37 = sphi 0, %s35
      %s38 = sphi 0, %s36
      %s50 = sphi 0, %s52
      %s53 = sphi 0, %s50
      %s54 = sphi 0, %s53
      %s70 = sphi 0, %s54
      %s76 = sphi 0, %s78
      %s79 = sphi 0, %s76
      %s80 = sphi 0, %s79
      %s96 = sphi 0, %s80
      %s104 = sphi 0, %s106
      %s107 = sphi 0, %s104
      %s108 = sphi 0, %s107
      %s124 = sphi 0, %s108
      %s132 = sphi 0, %s134
      %s135 = sphi 0, %s132
      %s136 = sphi 0, %s135
      %s152 = sphi 0, %s136
      %s158 = sphi 0, %s160
      %s161 = sphi 0, %s158
      %s162 = sphi 0, %s161
      %s178 = sphi 0, %s162
      %s184 = sphi 0, %s186
      %s187 = sphi 0, %s184
      %s188 = sphi 0, %s187
      %s204 = sphi 0, %s188
      %s208 = sphi 0, %s208
      %s210 = sphi 0, %s208
      %s211 = sphi 0, %s210
      %s225 = sphi 0, %s211
      %s229 = sphi 0, %s229
      %s231 = sphi 0, %s229
      %s232 = sphi 0, %s231
      %s246 = sphi 0, %s232
      %s250 = sphi 0, %s250
      %s252 = sphi 0, %s250
      %s253 = sphi 0, %s252
      %s267 = sphi 0, %s253
      %s271 = sphi 0, %s271
      %s273 = sphi 0, %s271
      %s274 = sphi 0, %s273
      %s288 = sphi 0, %s274
      %s294 = sphi 0, %s296
      %s297 = sphi 0, %s294
      %s298 = sphi 0, %s297
      %s314 = sphi 0, %s298
      %s322 = sphi 0, %s324
      %s325 = sphi 0, %s322
      %s326 = sphi 0, %s325
      %s342 = sphi 0, %s326
    $region4: #{tpu_custom_call.1} parent=1 // loop_header_branch
      %29 = sbr.rel (%p27) target = $region8
    $region5: #{tpu_custom_call.1} parent=1 // loop_body
      %s31 = ssub.s32 %s26, 1
      %s32 = ssub.s32 %s26, 2
      %s39 = sadd.s32 1, %s34
      %p40 = scmp.ge.s32.totalorder %s39, 2
      %s41 = scalar_select %p40, 0, %s39
      %s42 = sadd.s32 1, %s33
      %s43 = scalar_select %p40, %s42, %s33
      %p44 = scmp.ge.s32.totalorder %s43, 2
      %s45 = scalar_select %p44, 0, %s43
      %s46 = ssub.s32 %s33, %s45
      %s47 = ssub.s32 %s34, %s41
      %s48 = sor.u32 %s46, %s47
      %p49 = scmp.eq.s32.totalorder %s48, 0
      %s51 = sadd.s32 %s50, 1
      %s52 = scalar_select %p49, %s50, %s51
      %p55 = pneg %p49
      %p56 = scmp.eq.s32.totalorder %s26, 3
      %p57 = por %p55, %p56
      %p58 = scmp.ne.s32.totalorder %s50, %s53
      %p59 = scmp.eq.s32.totalorder %s26, 0
      %p60 = por %p58, %p59
      %p61 = scmp.ne.s32.totalorder %s50, %s53
      %p62 = scmp.eq.s32.totalorder %s31, 3
      %p63 = por %p61, %p62
      %p64 = scmp.ne.s32.totalorder %s53, %s54
      %p65 = scmp.eq.s32.totalorder %s31, 0
      %p66 = por %p64, %p65
      %p67 = scmp.ne.s32.totalorder %s53, %s54
      %p68 = scmp.eq.s32.totalorder %s32, 3
      %p69 = por %p67, %p68
      %p71 = scmp.ne.s32.totalorder %s54, %s70
      %p72 = scmp.eq.s32.totalorder %s32, 0
      %p73 = por %p71, %p72
      %s74 = ssub.s32 %s33, %s45
      %p75 = scmp.eq.s32.totalorder %s74, 0
      %s77 = sadd.s32 %s76, 1
      %s78 = scalar_select %p75, %s76, %s77
      %p81 = pneg %p75
      %p82 = scmp.eq.s32.totalorder %s26, 3
      %p83 = por %p81, %p82
      %p84 = scmp.ne.s32.totalorder %s76, %s79
      %p85 = scmp.eq.s32.totalorder %s26, 0
      %p86 = por %p84, %p85
      %p87 = scmp.ne.s32.totalorder %s76, %s79
      %p88 = scmp.eq.s32.totalorder %s31, 3
      %p89 = por %p87, %p88
      %p90 = scmp.ne.s32.totalorder %s79, %s80
      %p91 = scmp.eq.s32.totalorder %s31, 0
      %p92 = por %p90, %p91
      %p93 = scmp.ne.s32.totalorder %s79, %s80
      %p94 = scmp.eq.s32.totalorder %s32, 3
      %p95 = por %p93, %p94
      %p97 = scmp.ne.s32.totalorder %s80, %s96
      %p98 = scmp.eq.s32.totalorder %s32, 0
      %p99 = por %p97, %p98
      %s100 = ssub.s32 %s33, %s45
      %s101 = ssub.s32 %s34, %s41
      %s102 = sor.u32 %s100, %s101
      %p103 = scmp.eq.s32.totalorder %s102, 0
      %s105 = sadd.s32 %s104, 1
      %s106 = scalar_select %p103, %s104, %s105
      %p109 = pneg %p103
      %p110 = scmp.eq.s32.totalorder %s26, 3
      %p111 = por %p109, %p110
      %p112 = scmp.ne.s32.totalorder %s104, %s107
      %p113 = scmp.eq.s32.totalorder %s26, 0
      %p114 = por %p112, %p113
      %p115 = scmp.ne.s32.totalorder %s104, %s107
      %p116 = scmp.eq.s32.totalorder %s31, 3
      %p117 = por %p115, %p116
      %p118 = scmp.ne.s32.totalorder %s107, %s108
      %p119 = scmp.eq.s32.totalorder %s31, 0
      %p120 = por %p118, %p119
      %p121 = scmp.ne.s32.totalorder %s107, %s108
      %p122 = scmp.eq.s32.totalorder %s32, 3
      %p123 = por %p121, %p122
      %p125 = scmp.ne.s32.totalorder %s108, %s124
      %p126 = scmp.eq.s32.totalorder %s32, 0
      %p127 = por %p125, %p126
      %s128 = ssub.s32 %s33, %s45
      %s129 = ssub.s32 %s34, %s41
      %s130 = sor.u32 %s128, %s129
      %p131 = scmp.eq.s32.totalorder %s130, 0
      %s133 = sadd.s32 %s132, 1
      %s134 = scalar_select %p131, %s132, %s133
      %p137 = pneg %p131
      %p138 = scmp.eq.s32.totalorder %s26, 3
      %p139 = por %p137, %p138
      %p140 = scmp.ne.s32.totalorder %s132, %s135
      %p141 = scmp.eq.s32.totalorder %s26, 0
      %p142 = por %p140, %p141
      %p143 = scmp.ne.s32.totalorder %s132, %s135
      %p144 = scmp.eq.s32.totalorder %s31, 3
      %p145 = por %p143, %p144
      %p146 = scmp.ne.s32.totalorder %s135, %s136
      %p147 = scmp.eq.s32.totalorder %s31, 0
      %p148 = por %p146, %p147
      %p149 = scmp.ne.s32.totalorder %s135, %s136
      %p150 = scmp.eq.s32.totalorder %s32, 3
      %p151 = por %p149, %p150
      %p153 = scmp.ne.s32.totalorder %s136, %s152
      %p154 = scmp.eq.s32.totalorder %s32, 0
      %p155 = por %p153, %p154
      %s156 = ssub.s32 %s33, %s45
      %p157 = scmp.eq.s32.totalorder %s156, 0
      %s159 = sadd.s32 %s158, 1
      %s160 = scalar_select %p157, %s158, %s159
      %p163 = pneg %p157
      %p164 = scmp.eq.s32.totalorder %s26, 3
      %p165 = por %p163, %p164
      %p166 = scmp.ne.s32.totalorder %s158, %s161
      %p167 = scmp.eq.s32.totalorder %s26, 0
      %p168 = por %p166, %p167
      %p169 = scmp.ne.s32.totalorder %s158, %s161
      %p170 = scmp.eq.s32.totalorder %s31, 3
      %p171 = por %p169, %p170
      %p172 = scmp.ne.s32.totalorder %s161, %s162
      %p173 = scmp.eq.s32.totalorder %s31, 0
      %p174 = por %p172, %p173
      %p175 = scmp.ne.s32.totalorder %s161, %s162
      %p176 = scmp.eq.s32.totalorder %s32, 3
      %p177 = por %p175, %p176
      %p179 = scmp.ne.s32.totalorder %s162, %s178
      %p180 = scmp.eq.s32.totalorder %s32, 0
      %p181 = por %p179, %p180
      %s182 = ssub.s32 %s33, %s45
      %p183 = scmp.eq.s32.totalorder %s182, 0
      %s185 = sadd.s32 %s184, 1
      %s186 = scalar_select %p183, %s184, %s185
      %p189 = pneg %p183
      %p190 = scmp.eq.s32.totalorder %s26, 3
      %p191 = por %p189, %p190
      %p192 = scmp.ne.s32.totalorder %s184, %s187
      %p193 = scmp.eq.s32.totalorder %s26, 0
      %p194 = por %p192, %p193
      %p195 = scmp.ne.s32.totalorder %s184, %s187
      %p196 = scmp.eq.s32.totalorder %s31, 3
      %p197 = por %p195, %p196
      %p198 = scmp.ne.s32.totalorder %s187, %s188
      %p199 = scmp.eq.s32.totalorder %s31, 0
      %p200 = por %p198, %p199
      %p201 = scmp.ne.s32.totalorder %s187, %s188
      %p202 = scmp.eq.s32.totalorder %s32, 3
      %p203 = por %p201, %p202
      %p205 = scmp.ne.s32.totalorder %s188, %s204
      %p206 = scmp.eq.s32.totalorder %s32, 0
      %p207 = por %p205, %p206
      %s209 = sadd.s32 %s208, 1
      %p212 = scmp.eq.s32.totalorder %s26, 3
      %p213 = scmp.ne.s32.totalorder %s208, %s210
      %p214 = scmp.eq.s32.totalorder %s26, 0
      %p215 = por %p213, %p214
      %p216 = scmp.ne.s32.totalorder %s208, %s210
      %p217 = scmp.eq.s32.totalorder %s31, 3
      %p218 = por %p216, %p217
      %p219 = scmp.ne.s32.totalorder %s210, %s211
      %p220 = scmp.eq.s32.totalorder %s31, 0
      %p221 = por %p219, %p220
      %p222 = scmp.ne.s32.totalorder %s210, %s211
      %p223 = scmp.eq.s32.totalorder %s32, 3
      %p224 = por %p222, %p223
      %p226 = scmp.ne.s32.totalorder %s211, %s225
      %p227 = scmp.eq.s32.totalorder %s32, 0
      %p228 = por %p226, %p227
      %s230 = sadd.s32 %s229, 1
      %p233 = scmp.eq.s32.totalorder %s26, 3
      %p234 = scmp.ne.s32.totalorder %s229, %s231
      %p235 = scmp.eq.s32.totalorder %s26, 0
      %p236 = por %p234, %p235
      %p237 = scmp.ne.s32.totalorder %s229, %s231
      %p238 = scmp.eq.s32.totalorder %s31, 3
      %p239 = por %p237, %p238
      %p240 = scmp.ne.s32.totalorder %s231, %s232
      %p241 = scmp.eq.s32.totalorder %s31, 0
      %p242 = por %p240, %p241
      %p243 = scmp.ne.s32.totalorder %s231, %s232
      %p244 = scmp.eq.s32.totalorder %s32, 3
      %p245 = por %p243, %p244
      %p247 = scmp.ne.s32.totalorder %s232, %s246
      %p248 = scmp.eq.s32.totalorder %s32, 0
      %p249 = por %p247, %p248
      %s251 = sadd.s32 %s250, 1
      %p254 = scmp.eq.s32.totalorder %s26, 3
      %p255 = scmp.ne.s32.totalorder %s250, %s252
      %p256 = scmp.eq.s32.totalorder %s26, 0
      %p257 = por %p255, %p256
      %p258 = scmp.ne.s32.totalorder %s250, %s252
      %p259 = scmp.eq.s32.totalorder %s31, 3
      %p260 = por %p258, %p259
      %p261 = scmp.ne.s32.totalorder %s252, %s253
      %p262 = scmp.eq.s32.totalorder %s31, 0
      %p263 = por %p261, %p262
      %p264 = scmp.ne.s32.totalorder %s252, %s253
      %p265 = scmp.eq.s32.totalorder %s32, 3
      %p266 = por %p264, %p265
      %p268 = scmp.ne.s32.totalorder %s253, %s267
      %p269 = scmp.eq.s32.totalorder %s32, 0
      %p270 = por %p268, %p269
      %s272 = sadd.s32 %s271, 1
      %p275 = scmp.eq.s32.totalorder %s26, 3
      %p276 = scmp.ne.s32.totalorder %s271, %s273
      %p277 = scmp.eq.s32.totalorder %s26, 0
      %p278 = por %p276, %p277
      %p279 = scmp.ne.s32.totalorder %s271, %s273
      %p280 = scmp.eq.s32.totalorder %s31, 3
      %p281 = por %p279, %p280
      %p282 = scmp.ne.s32.totalorder %s273, %s274
      %p283 = scmp.eq.s32.totalorder %s31, 0
      %p284 = por %p282, %p283
      %p285 = scmp.ne.s32.totalorder %s273, %s274
      %p286 = scmp.eq.s32.totalorder %s32, 3
      %p287 = por %p285, %p286
      %p289 = scmp.ne.s32.totalorder %s274, %s288
      %p290 = scmp.eq.s32.totalorder %s32, 0
      %p291 = por %p289, %p290
      %s292 = ssub.s32 %s33, %s45
      %p293 = scmp.eq.s32.totalorder %s292, 0
      %s295 = sadd.s32 %s294, 1
      %s296 = scalar_select %p293, %s294, %s295
      %p299 = pneg %p293
      %p300 = scmp.eq.s32.totalorder %s26, 3
      %p301 = por %p299, %p300
      %p302 = scmp.ne.s32.totalorder %s294, %s297
      %p303 = scmp.eq.s32.totalorder %s26, 0
      %p304 = por %p302, %p303
      %p305 = scmp.ne.s32.totalorder %s294, %s297
      %p306 = scmp.eq.s32.totalorder %s31, 3
      %p307 = por %p305, %p306
      %p308 = scmp.ne.s32.totalorder %s297, %s298
      %p309 = scmp.eq.s32.totalorder %s31, 0
      %p310 = por %p308, %p309
      %p311 = scmp.ne.s32.totalorder %s297, %s298
      %p312 = scmp.eq.s32.totalorder %s32, 3
      %p313 = por %p311, %p312
      %p315 = scmp.ne.s32.totalorder %s298, %s314
      %p316 = scmp.eq.s32.totalorder %s32, 0
      %p317 = por %p315, %p316
      %s318 = ssub.s32 %s33, %s45
      %s319 = ssub.s32 %s34, %s41
      %s320 = sor.u32 %s318, %s319
      %p321 = scmp.eq.s32.totalorder %s320, 0
      %s323 = sadd.s32 %s322, 1
      %s324 = scalar_select %p321, %s322, %s323
      %p327 = pneg %p321
      %p328 = scmp.eq.s32.totalorder %s26, 3
      %p329 = por %p327, %p328
      %p330 = scmp.ne.s32.totalorder %s322, %s325
      %p331 = scmp.eq.s32.totalorder %s26, 0
      %p332 = por %p330, %p331
      %p333 = scmp.ne.s32.totalorder %s322, %s325
      %p334 = scmp.eq.s32.totalorder %s31, 3
      %p335 = por %p333, %p334
      %p336 = scmp.ne.s32.totalorder %s325, %s326
      %p337 = scmp.eq.s32.totalorder %s31, 0
      %p338 = por %p336, %p337
      %p339 = scmp.ne.s32.totalorder %s325, %s326
      %p340 = scmp.eq.s32.totalorder %s32, 3
      %p341 = por %p339, %p340
      %p343 = scmp.ne.s32.totalorder %s326, %s342
      %p344 = scmp.eq.s32.totalorder %s32, 0
      %p345 = por %p343, %p344
      %p346 = scmp.le.s32.totalorder 1, %s26
      %p347 = scmp.lt.s32.totalorder %s26, 5
      %p348 = pnand %p346, %p347
      %p349 = pneg %p348
      // Predicated region
      $region9: #{tpu_custom_call.1} parent=5 // pred_check
        _
      $region10: #{tpu_custom_call.1} parent=5 // pred_check_branch
        %351 = sbr.rel (%p348) target = $region12
      $region11: #{tpu_custom_call.1} parent=5 // pred_region
        %s352 = ssub.s32 %s26, 1
        // Predicated region
        $region13: #{tpu_custom_call.1} parent=11 // pred_check
          %p353 = pneg %p92
        $region14: #{tpu_custom_call.1} parent=11 // pred_check_branch
          %355 = sbr.rel (%p353) target = $region16
        $region15: #{tpu_custom_call.1} parent=11 // pred_region
          %p356 = scmp.lt.s32.totalorder %s35, 1
          %s357 = scalar_select %p356, %s35, 1
          %s358 = smul.addr %s357, 4
          %s359 = scalar_lea.vmem %s1, %s358
        $region16: #{tpu_custom_call.1} parent=11 // pred_fallthru
          _
        // Predicated region
        $region17: #{tpu_custom_call.1} parent=11 // pred_check
          %p360 = pneg %p174
        $region18: #{tpu_custom_call.1} parent=11 // pred_check_branch
          %362 = sbr.rel (%p360) target = $region20
        $region19: #{tpu_custom_call.1} parent=11 // pred_region
          %p363 = scmp.lt.s32.totalorder %s35, 1
          %s364 = scalar_select %p363, %s35, 1
          %s365 = smul.addr %s364, 8
          %s366 = scalar_lea.vmem %s4, %s365
        $region20: #{tpu_custom_call.1} parent=11 // pred_fallthru
          _
        // Predicated region
        $region21: #{tpu_custom_call.1} parent=11 // pred_check
          %p367 = pneg %p200
        $region22: #{tpu_custom_call.1} parent=11 // pred_check_branch
          %369 = sbr.rel (%p367) target = $region24
        $region23: #{tpu_custom_call.1} parent=11 // pred_region
          %p370 = scmp.lt.s32.totalorder %s35, 1
          %s371 = scalar_select %p370, %s35, 1
          %s372 = scalar_lea.vmem %s5, %s371
        $region24: #{tpu_custom_call.1} parent=11 // pred_fallthru
          _
        // Predicated region
        $region25: #{tpu_custom_call.1} parent=11 // pred_check
          %p373 = pneg %p221
        $region26: #{tpu_custom_call.1} parent=11 // pred_check_branch
          %375 = sbr.rel (%p373) target = $region28
        $region27: #{tpu_custom_call.1} parent=11 // pred_region
          %377 = vsyncadd [#allocation6], 0
          %s378 = sshll.u32 %s6, 4
          %s379 = int_to_ptr.hbm [resolvable:$true] %s378
          %s380 = sshll.u32 [#allocation5], 4
          %s381 = int_to_ptr.vmem [resolvable:$true] %s380
          %386 = dma.hbm_to_vmem [thread:$0]  %s379, 1024, %s381, [#allocation6], 64, 64, 4
        $region28: #{tpu_custom_call.1} parent=11 // pred_fallthru
          _
        // Predicated region
        $region29: #{tpu_custom_call.1} parent=11 // pred_check
          %p387 = pneg %p242
        $region30: #{tpu_custom_call.1} parent=11 // pred_check_branch
          %389 = sbr.rel (%p387) target = $region32
        $region31: #{tpu_custom_call.1} parent=11 // pred_region
          _
        $region32: #{tpu_custom_call.1} parent=11 // pred_fallthru
          _
        // Predicated region
        $region33: #{tpu_custom_call.1} parent=11 // pred_check
          %p390 = pneg %p263
        $region34: #{tpu_custom_call.1} parent=11 // pred_check_branch
          %392 = sbr.rel (%p390) target = $region36
        $region35: #{tpu_custom_call.1} parent=11 // pred_region
          %394 = vsyncadd [#allocation9], 0
          %s395 = sshll.u32 %s8, 4
          %s396 = int_to_ptr.hbm [resolvable:$true] %s395
          %s397 = sshll.u32 [#allocation8], 4
          %s398 = int_to_ptr.vmem [resolvable:$true] %s397
          %403 = dma.hbm_to_vmem [thread:$0]  %s396, 1024, %s398, [#allocation9], 64, 64, 4
        $region36: #{tpu_custom_call.1} parent=11 // pred_fallthru
          _
        // Predicated region
        $region37: #{tpu_custom_call.1} parent=11 // pred_check
          %p404 = pneg %p284
        $region38: #{tpu_custom_call.1} parent=11 // pred_check_branch
          %406 = sbr.rel (%p404) target = $region40
        $region39: #{tpu_custom_call.1} parent=11 // pred_region
          _
        $region40: #{tpu_custom_call.1} parent=11 // pred_fallthru
          _
      $region12: #{tpu_custom_call.1} parent=5 // pred_fallthru
        _
      %p407 = scmp.lt.s32.totalorder %s26, 4
      // Predicated region
      $region41: #{tpu_custom_call.1} parent=5 // pred_check
        %p408 = pneg %p407
      $region42: #{tpu_custom_call.1} parent=5 // pred_check_branch
        %410 = sbr.rel (%p408) target = $region44
      $region43: #{tpu_custom_call.1} parent=5 // pred_region
        // Predicated region
        $region45: #{tpu_custom_call.1} parent=43 // pred_check
          %p411 = pneg %p60
        $region46: #{tpu_custom_call.1} parent=43 // pred_check_branch
          %413 = sbr.rel (%p411) target = $region48
        $region47: #{tpu_custom_call.1} parent=43 // pred_region
          %p414 = scmp.lt.s32.totalorder %s33, 1
          %s415 = scalar_select %p414, %s33, 1
          %p416 = scmp.lt.s32.totalorder %s34, 1
          %s417 = scalar_select %p416, %s34, 1
          %s418 = smul.addr %s415, 2
          %s419 = sadd.s32 %s417, %s418
          %s420 = smul.addr %s419, 4
          %s421 = scalar_lea.vmem %s0, %s420
        $region48: #{tpu_custom_call.1} parent=43 // pred_fallthru
          _
        // Predicated region
        $region49: #{tpu_custom_call.1} parent=43 // pred_check
          %p422 = pneg %p114
        $region50: #{tpu_custom_call.1} parent=43 // pred_check_branch
          %424 = sbr.rel (%p422) target = $region52
        $region51: #{tpu_custom_call.1} parent=43 // pred_region
          %p425 = scmp.lt.s32.totalorder %s33, 1
          %s426 = scalar_select %p425, %s33, 1
          %p427 = scmp.lt.s32.totalorder %s34, 1
          %s428 = scalar_select %p427, %s34, 1
          %s429 = smul.addr %s426, 2
          %s430 = sadd.s32 %s428, %s429
          %s431 = smul.addr %s430, 8
          %s432 = scalar_lea.vmem %s2, %s431
        $region52: #{tpu_custom_call.1} parent=43 // pred_fallthru
          _
        // Predicated region
        $region53: #{tpu_custom_call.1} parent=43 // pred_check
          %p433 = pneg %p142
        $region54: #{tpu_custom_call.1} parent=43 // pred_check_branch
          %435 = sbr.rel (%p433) target = $region56
        $region55: #{tpu_custom_call.1} parent=43 // pred_region
          %p436 = scmp.lt.s32.totalorder %s33, 1
          %s437 = scalar_select %p436, %s33, 1
          %p438 = scmp.lt.s32.totalorder %s34, 1
          %s439 = scalar_select %p438, %s34, 1
          %s440 = smul.addr %s437, 2
          %s441 = sadd.s32 %s439, %s440
          %s442 = scalar_lea.vmem %s3, %s441
        $region56: #{tpu_custom_call.1} parent=43 // pred_fallthru
          _
      $region44: #{tpu_custom_call.1} parent=5 // pred_fallthru
        _
      %p443 = scmp.le.s32.totalorder 1, %s26
      %p444 = scmp.lt.s32.totalorder %s26, 5
      %p445 = pnand %p443, %p444
      %p446 = pneg %p445
      // Predicated region
      $region57: #{tpu_custom_call.1} parent=5 // pred_check
        _
      $region58: #{tpu_custom_call.1} parent=5 // pred_check_branch
        %448 = sbr.rel (%p445) target = $region60
      $region59: #{tpu_custom_call.1} parent=5 // pred_region
        %s449 = ssub.s32 %s26, 1
        // Predicated region
        $region61: #{tpu_custom_call.1} parent=59 // pred_check
          %p450 = pneg %p221
        $region62: #{tpu_custom_call.1} parent=59 // pred_check_branch
          %452 = sbr.rel (%p450) target = $region64
        $region63: #{tpu_custom_call.1} parent=59 // pred_region
          %454 = dma.done [#allocation6], 1024
        $region64: #{tpu_custom_call.1} parent=59 // pred_fallthru
          _
        // Predicated region
        $region65: #{tpu_custom_call.1} parent=59 // pred_check
          %p455 = pneg %p263
        $region66: #{tpu_custom_call.1} parent=59 // pred_check_branch
          %457 = sbr.rel (%p455) target = $region68
        $region67: #{tpu_custom_call.1} parent=59 // pred_region
          %459 = dma.done [#allocation9], 1024
        $region68: #{tpu_custom_call.1} parent=59 // pred_fallthru
          _
        %p460 = scmp.lt.s32.totalorder %s35, 1
        %s461 = scalar_select %p460, %s35, 1
        %p462 = scmp.lt.s32.totalorder %s36, 1
        %s463 = scalar_select %p462, %s36, 1
        %s464 = smul.addr %s461, 2
        %s465 = sadd.s32 %s463, %s464
        %s466 = smul.addr %s465, 4
        %s467 = scalar_lea.vmem %s0, %s466
        %p468 = pneg %p66
        %p469 = pneg %p63
        %p470 = scmp.lt.s32.totalorder %s35, 1
        %s471 = scalar_select %p470, %s35, 1
        %s472 = smul.addr %s471, 4
        %s473 = scalar_lea.vmem %s1, %s472
        %p474 = pneg %p92
        %p475 = pneg %p89
        %p476 = scmp.lt.s32.totalorder %s35, 1
        %s477 = scalar_select %p476, %s35, 1
        %p478 = scmp.lt.s32.totalorder %s36, 1
        %s479 = scalar_select %p478, %s36, 1
        %s480 = smul.addr %s477, 2
        %s481 = sadd.s32 %s479, %s480
        %s482 = smul.addr %s481, 8
        %s483 = scalar_lea.vmem %s2, %s482
        %p484 = pneg %p120
        %p485 = pneg %p117
        %p486 = scmp.lt.s32.totalorder %s35, 1
        %s487 = scalar_select %p486, %s35, 1
        %p488 = scmp.lt.s32.totalorder %s36, 1
        %s489 = scalar_select %p488, %s36, 1
        %s490 = smul.addr %s487, 2
        %s491 = sadd.s32 %s489, %s490
        %s492 = scalar_lea.vmem %s3, %s491
        %p493 = pneg %p148
        %p494 = pneg %p145
        %p495 = scmp.lt.s32.totalorder %s35, 1
        %s496 = scalar_select %p495, %s35, 1
        %s497 = smul.addr %s496, 8
        %s498 = scalar_lea.vmem %s4, %s497
        %p499 = pneg %p174
        %p500 = pneg %p171
        %p501 = scmp.lt.s32.totalorder %s35, 1
        %s502 = scalar_select %p501, %s35, 1
        %s503 = scalar_lea.vmem %s5, %s502
        %p504 = pneg %p200
        %p505 = pneg %p197
        %p506 = pneg %p221
        %p507 = pneg %p218
        %p508 = pneg %p242
        %p509 = pneg %p239
        %p510 = pneg %p263
        %p511 = pneg %p260
        %p512 = pneg %p284
        %p513 = pneg %p281
        %p514 = pneg %p310
        %p515 = pneg %p307
        %s516 = sand.u32 %s297, 1
        %s517 = scalar_lea.sflag [#allocation7], %s516
        %s518 = sand.u32 %s297, 1
        %s519 = smul.addr %s518, 8
        %s520 = scalar_lea.vmem [#allocation10], %s519
        %p521 = pneg %p338
        %p522 = pneg %p335
        %s523 = sand.u32 %s325, 1
        %s524 = scalar_lea.sflag [#allocation12], %s523
        %s525 = sand.u32 %s325, 1
        %s526 = smul.addr %s525, 8
        %s527 = scalar_lea.vmem [#allocation11], %s526
        %p528 = scmp.lt.s32.totalorder %s35, 1
        %s529 = scalar_select %p528, %s35, 1
        %p530 = scmp.lt.s32.totalorder %s36, 1
        %s531 = scalar_select %p530, %s36, 1
        %s532 = smul.addr %s529, 2
        %s533 = sadd.s32 %s531, %s532
        %s534 = smul.addr %s533, 4
        %s535 = scalar_lea.vmem %s0, %s534
        %p536 = scmp.lt.s32.totalorder %s35, 1
        %s537 = scalar_select %p536, %s35, 1
        %s538 = smul.addr %s537, 4
        %s539 = scalar_lea.vmem %s1, %s538
        %p540 = scmp.lt.s32.totalorder %s35, 1
        %s541 = scalar_select %p540, %s35, 1
        %p542 = scmp.lt.s32.totalorder %s36, 1
        %s543 = scalar_select %p542, %s36, 1
        %s544 = smul.addr %s541, 2
        %s545 = sadd.s32 %s543, %s544
        %s546 = smul.addr %s545, 8
        %s547 = scalar_lea.vmem %s2, %s546
        %p548 = scmp.lt.s32.totalorder %s35, 1
        %s549 = scalar_select %p548, %s35, 1
        %p550 = scmp.lt.s32.totalorder %s36, 1
        %s551 = scalar_select %p550, %s36, 1
        %s552 = smul.addr %s549, 2
        %s553 = sadd.s32 %s551, %s552
        %s554 = scalar_lea.vmem %s3, %s553
        %p555 = scmp.lt.s32.totalorder %s35, 1
        %s556 = scalar_select %p555, %s35, 1
        %s557 = smul.addr %s556, 8
        %s558 = scalar_lea.vmem %s4, %s557
        %p559 = scmp.lt.s32.totalorder %s35, 1
        %s560 = scalar_select %p559, %s35, 1
        %s561 = scalar_lea.vmem %s5, %s560
        %p563 = scmp.eq.s32.totalorder %s36, 0
        // Predicated region
        $region69: #{tpu_custom_call.1} parent=59 // pred_check
          %p564 = pneg %p563
        $region70: #{tpu_custom_call.1} parent=59 // pred_check_branch
          %566 = sbr.rel (%p564) target = $region72
        $region71: #{tpu_custom_call.1} parent=59 // pred_region
          %v567 = vld [vmem:[%s539] sm:$0xf]
          %v568 = vld [vmem:[#allocation8] sm:$0xf]
          %v569 = vld [vmem:[#allocation8 + $0x4] sm:$0xf]
          %v570 = vld [vmem:[#allocation8 + $0x8] sm:$0xf]
          %v571 = vld [vmem:[#allocation8 + $0xc] sm:$0xf]
          %v572 = vld [vmem:[#allocation8 + $0x10] sm:$0xf]
          %v573 = vld [vmem:[#allocation8 + $0x14] sm:$0xf]
          %v574 = vld [vmem:[#allocation8 + $0x18] sm:$0xf]
          %v575 = vld [vmem:[#allocation8 + $0x1c] sm:$0xf]
          %v576 = vld [vmem:[#allocation8 + $0x20] sm:$0xf]
          %v577 = vld [vmem:[#allocation8 + $0x24] sm:$0xf]
          %v578 = vld [vmem:[#allocation8 + $0x28] sm:$0xf]
          %v579 = vld [vmem:[#allocation8 + $0x2c] sm:$0xf]
          %v580 = vld [vmem:[#allocation8 + $0x30] sm:$0xf]
          %v581 = vld [vmem:[#allocation8 + $0x34] sm:$0xf]
          %v582 = vld [vmem:[#allocation8 + $0x38] sm:$0xf]
          %v583 = vld [vmem:[#allocation8 + $0x3c] sm:$0xf]
          %v584 = vld [vmem:[%s9] sm:$0x1]
          %v586 = vperm.slane %v584, 0
          %v604 = vunpack.c.l.b16 %v568
          %v605 = vunpack.c.l.b16 %v569
          %v606 = vunpack.c.l.b16 %v570
          %v607 = vunpack.c.l.b16 %v571
          %v608 = vunpack.c.l.b16 %v572
          %v609 = vunpack.c.l.b16 %v573
          %v610 = vunpack.c.l.b16 %v574
          %v611 = vunpack.c.l.b16 %v575
          %v612 = vunpack.c.l.b16 %v576
          %v613 = vunpack.c.l.b16 %v577
          %v614 = vunpack.c.l.b16 %v578
          %v615 = vunpack.c.l.b16 %v579
          %v616 = vunpack.c.l.b16 %v580
          %v617 = vunpack.c.l.b16 %v581
          %v618 = vunpack.c.l.b16 %v582
          %v619 = vunpack.c.l.b16 %v583
          %v620 = vpack.c.b16 %v605, %v604
          %v621 = vpack.c.b16 %v607, %v606
          %v622 = vpack.c.b16 %v609, %v608
          %v623 = vpack.c.b16 %v611, %v610
          %v624 = vpack.c.b16 %v613, %v612
          %v625 = vpack.c.b16 %v615, %v614
          %v626 = vpack.c.b16 %v617, %v616
          %v627 = vpack.c.b16 %v619, %v618
          %636 = vmatpush.bf16.msra.mxu0 %v627
          %637 = vmatpush.bf16.msra.mxu0 %v626
          %638 = vmatpush.bf16.msra.mxu0 %v625
          %639 = vmatpush.bf16.msra.mxu0 %v624
          %640 = vmatpush.bf16.msra.mxu0 %v623
          %641 = vmatpush.bf16.msra.mxu0 %v622
          %642 = vmatpush.bf16.msra.mxu0 %v621
          %643 = vmatpush.bf16.msra.mxu0 %v620
          %644 = vmatmul.bf16.gmra.mxu0 %v567
          %v645 = vpop.f32.mrf.mxu0
          %v646 = vadd.f32 %v586, %v645
          %v647 = vpop.f32.mrf.mxu0
          %648 = vdwg.mxu0
          %v649 = vmax.f32 %v646, 0.0
          %v650 = vpack.c.bf16 %v649, %v649
          %651 = vst [vmem:[#allocation2] sm:$0xf] %v650
          %vm652 = vcmask 7168
          %653 = vst.msk [vmem:[#allocation3] sm:$0xff] %vm652, -inf
          %654 = vst.msk [vmem:[#allocation4] sm:$0xff] %vm652, 0.0
          %655 = vst [vmem:[%s520] sm:$0xff] 0.0
        $region72: #{tpu_custom_call.1} parent=59 // pred_fallthru
          _
        %v656 = vld [vmem:[%s535] sm:$0xf]
        %v657 = vld [vmem:[#allocation5] sm:$0xf]
        %v658 = vld [vmem:[#allocation5 + $0x4] sm:$0xf]
        %v659 = vld [vmem:[#allocation5 + $0x8] sm:$0xf]
        %v660 = vld [vmem:[#allocation5 + $0xc] sm:$0xf]
        %v661 = vld [vmem:[#allocation5 + $0x10] sm:$0xf]
        %v662 = vld [vmem:[#allocation5 + $0x14] sm:$0xf]
        %v663 = vld [vmem:[#allocation5 + $0x18] sm:$0xf]
        %v664 = vld [vmem:[#allocation5 + $0x1c] sm:$0xf]
        %v665 = vld [vmem:[#allocation5 + $0x20] sm:$0xf]
        %v666 = vld [vmem:[#allocation5 + $0x24] sm:$0xf]
        %v667 = vld [vmem:[#allocation5 + $0x28] sm:$0xf]
        %v668 = vld [vmem:[#allocation5 + $0x2c] sm:$0xf]
        %v669 = vld [vmem:[#allocation5 + $0x30] sm:$0xf]
        %v670 = vld [vmem:[#allocation5 + $0x34] sm:$0xf]
        %v671 = vld [vmem:[#allocation5 + $0x38] sm:$0xf]
        %v672 = vld [vmem:[#allocation5 + $0x3c] sm:$0xf]
        %v673 = vld [vmem:[%s7] sm:$0x1]
        %v675 = vperm.slane %v673, 0
        %v693 = vunpack.c.l.b16 %v657
        %v694 = vunpack.c.l.b16 %v658
        %v695 = vunpack.c.l.b16 %v659
        %v696 = vunpack.c.l.b16 %v660
        %v697 = vunpack.c.l.b16 %v661
        %v698 = vunpack.c.l.b16 %v662
        %v699 = vunpack.c.l.b16 %v663
        %v700 = vunpack.c.l.b16 %v664
        %v701 = vunpack.c.l.b16 %v665
        %v702 = vunpack.c.l.b16 %v666
        %v703 = vunpack.c.l.b16 %v667
        %v704 = vunpack.c.l.b16 %v668
        %v705 = vunpack.c.l.b16 %v669
        %v706 = vunpack.c.l.b16 %v670
        %v707 = vunpack.c.l.b16 %v671
        %v708 = vunpack.c.l.b16 %v672
        %v709 = vpack.c.b16 %v694, %v693
        %v710 = vpack.c.b16 %v696, %v695
        %v711 = vpack.c.b16 %v698, %v697
        %v712 = vpack.c.b16 %v700, %v699
        %v713 = vpack.c.b16 %v702, %v701
        %v714 = vpack.c.b16 %v704, %v703
        %v715 = vpack.c.b16 %v706, %v705
        %v716 = vpack.c.b16 %v708, %v707
        %725 = vmatpush.bf16.msra.mxu0 %v716
        %726 = vmatpush.bf16.msra.mxu0 %v715
        %727 = vmatpush.bf16.msra.mxu0 %v714
        %728 = vmatpush.bf16.msra.mxu0 %v713
        %729 = vmatpush.bf16.msra.mxu0 %v712
        %730 = vmatpush.bf16.msra.mxu0 %v711
        %731 = vmatpush.bf16.msra.mxu0 %v710
        %732 = vmatpush.bf16.msra.mxu0 %v709
        %733 = vmatmul.bf16.gmra.mxu0 %v656
        %v734 = vpop.f32.mrf.mxu0
        %v735 = vadd.f32 %v675, %v734
        %v736 = vpop.f32.mrf.mxu0
        %737 = vdwg.mxu0
        %v738 = vmax.f32 %v735, 0.0
        %v739 = vmul.f32 %v738, 0.25
        %v740 = vpack.c.bf16 %v739, %v739
        %v741 = vld [vmem:[#allocation2] sm:$0xf]
        %742 = vmatpush.bf16.xpose.msra.mxu0 0
        %743 = vmatpush.bf16.xpose.msra.mxu0 0
        %744 = vmatpush.bf16.xpose.msra.mxu0 0
        %745 = vmatpush.bf16.xpose.msra.mxu0 0
        %746 = vmatpush.bf16.xpose.msra.mxu0 0
        %747 = vmatpush.bf16.xpose.msra.mxu0 0
        %748 = vmatpush.bf16.xpose.msra.mxu0 0
        %749 = vmatpush.bf16.xpose.msra.mxu0 %v741
        %750 = vmatmul.bf16.gmra.mxu0 %v740
        %v751 = vpop.f32.mrf.mxu0
        %v752 = vadd.f32 0.0, %v751
        %v753 = vpop.f32.mrf.mxu0
        %754 = vdwg.mxu0
        %v755 = vld [vmem:[%s547] sm:$0xff]
        %v756 = vld [vmem:[%s561] sm:$0x1]
        %758 = vset.pattern.permute.xlu0 0
        %759 = vperm.xlu0 %758, %v755
        %v760 = vpop.permute.xlu0 %759
        %v763 = vperm.slane %v756, 0
        %v765 = vmul.f32 %v760, %v763
        %vm766 = vcmp.gt.f32.partialorder %v765, 0.0
        %v767 = vsel %vm766, %v752, -1e+09
        %vm768 = vcmask 64512
        %v769 = vsel %vm768, %v767, -inf
        %770 = vmax.xlane.f32.xlu0 %v769
        %v771 = vpop.xlane.xlu0 %770
        %v772 = vsub.f32 %v767, %v771
        %v773 = vmul.f32 %v772, 1.442695
        %v774 = vpow.pop %v773
        %v775 = vsel %vm768, %v774, 0.0
        %776 = vadd.xlane.f32.xlu0 %v775
        %v777 = vpop.xlane.xlu0 %776
        %v778 = vrcp.pop %v777
        %v779 = vmul.f32 %v774, %v778
        %v780 = vpack.c.bf16 %v779, %v779
        %v781 = vld [vmem:[%s539] sm:$0xf]
        %v783 = vsel %vm768, %v780, 0
        %vm785 = vcmask 1043456
        %v787 = vsel %vm785, %v781, 0
        %789 = vmatpush.bf16.msra.mxu0 0
        %790 = vmatpush.bf16.msra.mxu0 0
        %791 = vmatpush.bf16.msra.mxu0 0
        %792 = vmatpush.bf16.msra.mxu0 0
        %793 = vmatpush.bf16.msra.mxu0 0
        %794 = vmatpush.bf16.msra.mxu0 0
        %795 = vmatpush.bf16.msra.mxu0 0
        %796 = vmatpush.bf16.msra.mxu0 %v787
        %797 = vmatmul.bf16.gmra.mxu0 %v783
        %v798 = vpop.f32.mrf.mxu0
        %v799 = vadd.f32 0.0, %v798
        %v800 = vpop.f32.mrf.mxu0
        %801 = vdwg.mxu0
        %802 = vst [vmem:[%s527] sm:$0xff] %v799
        %803 = vmatpush.bf16.xpose.msra.mxu0 0
        %804 = vmatpush.bf16.xpose.msra.mxu0 0
        %805 = vmatpush.bf16.xpose.msra.mxu0 0
        %806 = vmatpush.bf16.xpose.msra.mxu0 0
        %807 = vmatpush.bf16.xpose.msra.mxu0 0
        %808 = vmatpush.bf16.xpose.msra.mxu0 0
        %809 = vmatpush.bf16.xpose.msra.mxu0 0
        %810 = vmatpush.bf16.xpose.msra.mxu0 %v740
        %811 = vmatmul.bf16.gmra.mxu0 %v741
        %v812 = vpop.f32.mrf.mxu0
        %v813 = vadd.f32 0.0, %v812
        %v814 = vpop.f32.mrf.mxu0
        %815 = vdwg.mxu0
        %v816 = vld [vmem:[%s558] sm:$0xff]
        %v817 = vld [vmem:[%s554] sm:$0x1]
        %819 = vset.pattern.permute.xlu0 0
        %820 = vperm.xlu0 %819, %v816
        %v821 = vpop.permute.xlu0 %820
        %v824 = vperm.slane %v817, 0
        %v826 = vmul.f32 %v821, %v824
        %vm827 = vcmp.gt.f32.partialorder %v826, 0.0
        %v828 = vsel %vm827, %v813, -1e+09
        %v829 = vld [vmem:[#allocation3] sm:$0xff]
        %v830 = vsel %vm768, %v828, -inf
        %831 = vmax.xlane.f32.xlu0 %v830
        %v832 = vpop.xlane.xlu0 %831
        %v833 = vmax.f32 %v829, %v832
        %v834 = vsub.f32 %v829, %v833
        %v835 = vmul.f32 %v834, 1.442695
        %v836 = vpow.pop %v835
        %838 = vset.pattern.permute.xlu0 0
        %839 = vperm.xlu0 %838, %v833
        %v840 = vpop.permute.xlu0 %839
        %v842 = vsub.f32 %v828, %v840
        %v843 = vmul.f32 %v842, 1.442695
        %v844 = vpow.pop %v843
        %v845 = vld [vmem:[#allocation4] sm:$0xff]
        %v846 = vmul.f32 %v836, %v845
        %v847 = vsel %vm768, %v844, 0.0
        %848 = vadd.xlane.f32.xlu0 %v847
        %v849 = vpop.xlane.xlu0 %848
        %v850 = vadd.f32 %v846, %v849
        %vm851 = vcmask 7168
        %852 = vst.msk [vmem:[#allocation4] sm:$0xff] %vm851, %v850
        %v853 = vld [vmem:[%s520] sm:$0xff]
        %855 = vset.pattern.permute.xlu0 0
        %856 = vperm.xlu0 %855, %v836
        %v857 = vpop.permute.xlu0 %856
        %v859 = vmul.f32 %v857, %v853
        %v860 = vpack.c.bf16 %v844, %v844
        %v862 = vsel %vm768, %v860, 0
        %v865 = vsel %vm785, %v656, 0
        %867 = vmatpush.bf16.msra.mxu0 0
        %868 = vmatpush.bf16.msra.mxu0 0
        %869 = vmatpush.bf16.msra.mxu0 0
        %870 = vmatpush.bf16.msra.mxu0 0
        %871 = vmatpush.bf16.msra.mxu0 0
        %872 = vmatpush.bf16.msra.mxu0 0
        %873 = vmatpush.bf16.msra.mxu0 0
        %874 = vmatpush.bf16.msra.mxu0 %v865
        %875 = vmatmul.bf16.gmra.mxu0 %v862
        %v876 = vpop.f32.mrf.mxu0
        %v877 = vadd.f32 0.0, %v876
        %v878 = vpop.f32.mrf.mxu0
        %879 = vdwg.mxu0
        %v880 = vadd.f32 %v859, %v877
        %881 = vst [vmem:[%s520] sm:$0xff] %v880
        %882 = vst.msk [vmem:[#allocation3] sm:$0xff] %vm851, %v833
        %p883 = scmp.eq.s32.totalorder %s36, 1
        // Predicated region
        $region73: #{tpu_custom_call.1} parent=59 // pred_check
          %p884 = pneg %p883
        $region74: #{tpu_custom_call.1} parent=59 // pred_check_branch
          %886 = sbr.rel (%p884) target = $region76
        $region75: #{tpu_custom_call.1} parent=59 // pred_region
          %v887 = vld [vmem:[%s520] sm:$0xff]
          %v888 = vld [vmem:[#allocation4] sm:$0xff]
          %v889 = vrcp.pop %v888
          %891 = vset.pattern.permute.xlu0 0
          %892 = vperm.xlu0 %891, %v889
          %v893 = vpop.permute.xlu0 %892
          %v895 = vmul.f32 %v887, %v893
          %896 = vst [vmem:[%s520] sm:$0xff] %v895
        $region76: #{tpu_custom_call.1} parent=59 // pred_fallthru
          _
        %s897 = sand.u32 %s297, 1
        %s898 = scalar_lea.sflag [#allocation7], %s897
        %s899 = sand.u32 %s297, 1
        %s900 = smul.addr %s899, 8
        %s901 = scalar_lea.vmem [#allocation10], %s900
        %s902 = sand.u32 %s325, 1
        %s903 = scalar_lea.sflag [#allocation12], %s902
        %s904 = sand.u32 %s325, 1
        %s905 = smul.addr %s904, 8
        %s906 = scalar_lea.vmem [#allocation11], %s905
        // Predicated region
        $region77: #{tpu_custom_call.1} parent=59 // pred_check
          %p907 = pneg %p307
        $region78: #{tpu_custom_call.1} parent=59 // pred_check_branch
          %909 = sbr.rel (%p907) target = $region80
        $region79: #{tpu_custom_call.1} parent=59 // pred_region
          %911 = vsyncadd %s898, 0
          %s912 = smul.addr %s35, 8
          %s913 = scalar_lea.hbm %s10, %s912
          %s915 = sshll.u32 %s901, 4
          %s916 = int_to_ptr.vmem [resolvable:$true] %s915
          %s917 = sshll.u32 %s913, 4
          %s918 = int_to_ptr.hbm [resolvable:$true] %s917
          %920 = dma.vmem_to_hbm [thread:$0]  %s916, 128, %s918, %s898
        $region80: #{tpu_custom_call.1} parent=59 // pred_fallthru
          _
        // Predicated region
        $region81: #{tpu_custom_call.1} parent=59 // pred_check
          %p921 = pneg %p335
        $region82: #{tpu_custom_call.1} parent=59 // pred_check_branch
          %923 = sbr.rel (%p921) target = $region84
        $region83: #{tpu_custom_call.1} parent=59 // pred_region
          %925 = vsyncadd %s903, 0
          %s926 = smul.addr %s35, 2
          %s927 = sadd.s32 %s36, %s926
          %s928 = smul.addr %s927, 8
          %s929 = scalar_lea.hbm %s11, %s928
          %s931 = sshll.u32 %s906, 4
          %s932 = int_to_ptr.vmem [resolvable:$true] %s931
          %s933 = sshll.u32 %s929, 4
          %s934 = int_to_ptr.hbm [resolvable:$true] %s933
          %936 = dma.vmem_to_hbm [thread:$0]  %s932, 128, %s934, %s903
        $region84: #{tpu_custom_call.1} parent=59 // pred_fallthru
          _
      $region60: #{tpu_custom_call.1} parent=5 // pred_fallthru
        _
      %p937 = scmp.le.s32.totalorder 2, %s26
      // Predicated region
      $region85: #{tpu_custom_call.1} parent=5 // pred_check
        %p938 = pneg %p937
      $region86: #{tpu_custom_call.1} parent=5 // pred_check_branch
        %940 = sbr.rel (%p938) target = $region88
      $region87: #{tpu_custom_call.1} parent=5 // pred_region
        %s941 = ssub.s32 %s26, 2
        // Predicated region
        $region89: #{tpu_custom_call.1} parent=87 // pred_check
          %p942 = pneg %p313
        $region90: #{tpu_custom_call.1} parent=87 // pred_check_branch
          %944 = sbr.rel (%p942) target = $region92
        $region91: #{tpu_custom_call.1} parent=87 // pred_region
          %s945 = sand.u32 %s298, 1
          %s946 = scalar_lea.sflag [#allocation7], %s945
          %s947 = sand.u32 %s298, 1
          %s948 = smul.addr %s947, 8
          %s949 = scalar_lea.vmem [#allocation10], %s948
          %951 = dma.done %s946, 128
        $region92: #{tpu_custom_call.1} parent=87 // pred_fallthru
          _
        // Predicated region
        $region93: #{tpu_custom_call.1} parent=87 // pred_check
          %p952 = pneg %p341
        $region94: #{tpu_custom_call.1} parent=87 // pred_check_branch
          %954 = sbr.rel (%p952) target = $region96
        $region95: #{tpu_custom_call.1} parent=87 // pred_region
          %s955 = sand.u32 %s326, 1
          %s956 = scalar_lea.sflag [#allocation12], %s955
          %s957 = sand.u32 %s326, 1
          %s958 = smul.addr %s957, 8
          %s959 = scalar_lea.vmem [#allocation11], %s958
          %961 = dma.done %s956, 128
        $region96: #{tpu_custom_call.1} parent=87 // pred_fallthru
          _
      $region88: #{tpu_custom_call.1} parent=5 // pred_fallthru
        _
    $region6: #{tpu_custom_call.1} parent=1 // loop_footer
      %s30 = sadd.s32 1, %s26
    $region7: #{tpu_custom_call.1} parent=1 // loop_footer_branch
      %25 = sbr.rel target = $region3
    $region8: #{tpu_custom_call.1} parent=1 // loop_exit
      _
    %962 = vsyncpa [#allocation6], 1
    %s963 = scalar_lea.sflag [#allocation6], 1
    %964 = vsyncpa %s963, 1
    %965 = vsyncpa [#allocation9], 1
    %966 = vsyncpa [#allocation7], 1
    %s967 = scalar_lea.sflag [#allocation7], 1
    %968 = vsyncpa %s967, 1
    %969 = vsyncpa [#allocation12], 1
    %s970 = scalar_lea.sflag [#allocation12], 1
    %971 = vsyncpa %s970, 1

// kernel: tpu_custom_call.1
$region0: #{tpu_custom_call.1}
  #allocation0 [shape = 'u32[]', space=smem, size = 0x4, offset = 0x4, fixed_abs, tag = 'smem constant byte address 0x4 - core index']
  #allocation1 [shape = 'u32[72,128]{1,0:T(1,128)}', space=vmem, size = 0x9000, scoped, tag = 'internal scratch']
  #allocation2 [shape = 'bf16[8,128]{1,0:T(8,128)(2,1)}', space=vmem, size = 0x800, scoped, tag = 'scratch operand']
  #allocation3 [shape = 'f32[8,1]{1,0:T(8,128)}', space=vmem, size = 0x1000, scoped, tag = 'scratch operand']
  #allocation4 [shape = 'f32[8,1]{1,0:T(8,128)}', space=vmem, size = 0x1000, scoped, tag = 'scratch operand']
  %s0 = inlined_call_operand.vmem [shape: bf16[2,16,128], index: 0, kind: input, shape index: {}]
  %s1 = inlined_call_operand.vmem [shape: bf16[2,8,128], index: 1, kind: input, shape index: {}]
  %s2 = inlined_call_operand.vmem [shape: f32[2,16,1], index: 2, kind: input, shape index: {}]
  %s3 = inlined_call_operand.vmem [shape: f32[2,2,1,8], index: 3, kind: input, shape index: {}]
  %s4 = inlined_call_operand.vmem [shape: f32[2,8,1], index: 4, kind: input, shape index: {}]
  %s5 = inlined_call_operand.vmem [shape: f32[2,1,8], index: 5, kind: input, shape index: {}]
  %s6 = inlined_call_operand.hbm [shape: bf16[128,128], index: 6, kind: input, shape index: {}]
  %s7 = inlined_call_operand.vmem [shape: f32[1,128], index: 7, kind: input, shape index: {}]
  %s8 = inlined_call_operand.hbm [shape: bf16[128,128], index: 8, kind: input, shape index: {}]
  %s9 = inlined_call_operand.vmem [shape: f32[1,128], index: 9, kind: input, shape index: {}]
  %s10 = inlined_call_operand.hbm [shape: f32[2,8,128], index: 10, kind: output, shape index: {0}]
  %s11 = inlined_call_operand.hbm [shape: f32[2,16,128], index: 11, kind: output, shape index: {1}]
  %12 = xla_tuple %s10, %s11
  %s13 = sld [smem:[#allocation0]]
  $region97: #{tpu_custom_call.1} parent=0
    _
  %s15 = ssub.s32 1, %s13
  %s16 = scalar_select 0, %s15, %s13
  $region1: #{tpu_custom_call.1} parent=0
    #allocation5 [shape = 'u8[32768]{0}', space=vmem, size = 0x8000, scoped, tag = 'input window, operand 6, single buffered']
    #allocation6 [shape = 's32[2]{0}', space=sflag, size = 0x8, scoped, tag = 'scoped memory for tpu_custom_call.1']
    #allocation7 [shape = 's32[2]{0}', space=sflag, size = 0x8, scoped, tag = 'scoped memory for tpu_custom_call.1']
    #allocation8 [shape = 'u8[32768]{0}', space=vmem, size = 0x8000, scoped, tag = 'input window, operand 8, single buffered']
    #allocation9 [shape = 's32[1]{0}', space=sflag, size = 0x4, scoped, tag = 'scoped memory for tpu_custom_call.1']
    #allocation10 [shape = 'u8[8192]{0}', space=vmem, size = 0x2000, scoped, tag = 'output window, operand 0']
    #allocation11 [shape = 'u8[8192]{0}', space=vmem, size = 0x2000, scoped, tag = 'output window, operand 1']
    #allocation12 [shape = 's32[2]{0}', space=sflag, size = 0x8, scoped, tag = 'scoped memory for tpu_custom_call.1']
    %17 = vsyncpa [#allocation6], 0
    %18 = vsyncpa [#allocation9], 0
    %19 = vsyncpa [#allocation7], 0
    %s20 = scalar_lea.sflag [#allocation7], 1
    %21 = vsyncpa %s20, 0
    %22 = vsyncpa [#allocation12], 0
    %s23 = scalar_lea.sflag [#allocation12], 1
    %24 = vsyncpa %s23, 0
    loop: start=0, step=1, limit=6
    $region2: #{tpu_custom_call.1} parent=1 // loop_pre_header
      _
    $region3: #{tpu_custom_call.1} parent=1 // loop_header
      %s26 = sphi 0, %s30
      %p27 = scmp.ge.s32.totalorder %s26, 6
      %s33 = sphi 0, %s45
      %s34 = sphi 0, %s41
      %s35 = sphi 0, %s33
      %s36 = sphi 0, %s34
      %s37 = sphi 0, %s35
      %s38 = sphi 0, %s36
      %s50 = sphi 0, %s52
      %s53 = sphi 0, %s50
      %s54 = sphi 0, %s53
      %s70 = sphi 0, %s54
      %s76 = sphi 0, %s78
      %s79 = sphi 0, %s76
      %s80 = sphi 0, %s79
      %s96 = sphi 0, %s80
      %s104 = sphi 0, %s106
      %s107 = sphi 0, %s104
      %s108 = sphi 0, %s107
      %s124 = sphi 0, %s108
      %s132 = sphi 0, %s134
      %s135 = sphi 0, %s132
      %s136 = sphi 0, %s135
      %s152 = sphi 0, %s136
      %s158 = sphi 0, %s160
      %s161 = sphi 0, %s158
      %s162 = sphi 0, %s161
      %s178 = sphi 0, %s162
      %s184 = sphi 0, %s186
      %s187 = sphi 0, %s184
      %s188 = sphi 0, %s187
      %s204 = sphi 0, %s188
      %s208 = sphi 0, %s208
      %s210 = sphi 0, %s208
      %s211 = sphi 0, %s210
      %s225 = sphi 0, %s211
      %s229 = sphi 0, %s229
      %s231 = sphi 0, %s229
      %s232 = sphi 0, %s231
      %s246 = sphi 0, %s232
      %s250 = sphi 0, %s250
      %s252 = sphi 0, %s250
      %s253 = sphi 0, %s252
      %s267 = sphi 0, %s253
      %s271 = sphi 0, %s271
      %s273 = sphi 0, %s271
      %s274 = sphi 0, %s273
      %s288 = sphi 0, %s274
      %s294 = sphi 0, %s296
      %s297 = sphi 0, %s294
      %s298 = sphi 0, %s297
      %s314 = sphi 0, %s298
      %s322 = sphi 0, %s324
      %s325 = sphi 0, %s322
      %s326 = sphi 0, %s325
      %s342 = sphi 0, %s326
    $region4: #{tpu_custom_call.1} parent=1 // loop_header_branch
      %29 = sbr.rel (%p27) target = $region8
    $region5: #{tpu_custom_call.1} parent=1 // loop_body
      %s31 = ssub.s32 %s26, 1
      %s32 = ssub.s32 %s26, 2
      %s39 = sadd.s32 1, %s34
      %p40 = scmp.ge.s32.totalorder %s39, 2
      %s41 = scalar_select %p40, 0, %s39
      %s42 = sadd.s32 1, %s33
      %s43 = scalar_select %p40, %s42, %s33
      %p44 = scmp.ge.s32.totalorder %s43, 2
      %s45 = scalar_select %p44, 0, %s43
      %s46 = ssub.s32 %s33, %s45
      %s47 = ssub.s32 %s34, %s41
      %s48 = sor.u32 %s46, %s47
      %p49 = scmp.eq.s32.totalorder %s48, 0
      %s51 = sadd.s32 %s50, 1
      %s52 = scalar_select %p49, %s50, %s51
      %p55 = pneg %p49
      %p56 = scmp.eq.s32.totalorder %s26, 3
      %p57 = por %p55, %p56
      %p58 = scmp.ne.s32.totalorder %s50, %s53
      %p59 = scmp.eq.s32.totalorder %s26, 0
      %p60 = por %p58, %p59
      %p61 = scmp.ne.s32.totalorder %s50, %s53
      %p62 = scmp.eq.s32.totalorder %s31, 3
      %p63 = por %p61, %p62
      %p64 = scmp.ne.s32.totalorder %s53, %s54
      %p65 = scmp.eq.s32.totalorder %s31, 0
      %p66 = por %p64, %p65
      %p67 = scmp.ne.s32.totalorder %s53, %s54
      %p68 = scmp.eq.s32.totalorder %s32, 3
      %p69 = por %p67, %p68
      %p71 = scmp.ne.s32.totalorder %s54, %s70
      %p72 = scmp.eq.s32.totalorder %s32, 0
      %p73 = por %p71, %p72
      %s74 = ssub.s32 %s33, %s45
      %p75 = scmp.eq.s32.totalorder %s74, 0
      %s77 = sadd.s32 %s76, 1
      %s78 = scalar_select %p75, %s76, %s77
      %p81 = pneg %p75
      %p82 = scmp.eq.s32.totalorder %s26, 3
      %p83 = por %p81, %p82
      %p84 = scmp.ne.s32.totalorder %s76, %s79
      %p85 = scmp.eq.s32.totalorder %s26, 0
      %p86 = por %p84, %p85
      %p87 = scmp.ne.s32.totalorder %s76, %s79
      %p88 = scmp.eq.s32.totalorder %s31, 3
      %p89 = por %p87, %p88
      %p90 = scmp.ne.s32.totalorder %s79, %s80
      %p91 = scmp.eq.s32.totalorder %s31, 0
      %p92 = por %p90, %p91
      %p93 = scmp.ne.s32.totalorder %s79, %s80
      %p94 = scmp.eq.s32.totalorder %s32, 3
      %p95 = por %p93, %p94
      %p97 = scmp.ne.s32.totalorder %s80, %s96
      %p98 = scmp.eq.s32.totalorder %s32, 0
      %p99 = por %p97, %p98
      %s100 = ssub.s32 %s33, %s45
      %s101 = ssub.s32 %s34, %s41
      %s102 = sor.u32 %s100, %s101
      %p103 = scmp.eq.s32.totalorder %s102, 0
      %s105 = sadd.s32 %s104, 1
      %s106 = scalar_select %p103, %s104, %s105
      %p109 = pneg %p103
      %p110 = scmp.eq.s32.totalorder %s26, 3
      %p111 = por %p109, %p110
      %p112 = scmp.ne.s32.totalorder %s104, %s107
      %p113 = scmp.eq.s32.totalorder %s26, 0
      %p114 = por %p112, %p113
      %p115 = scmp.ne.s32.totalorder %s104, %s107
      %p116 = scmp.eq.s32.totalorder %s31, 3
      %p117 = por %p115, %p116
      %p118 = scmp.ne.s32.totalorder %s107, %s108
      %p119 = scmp.eq.s32.totalorder %s31, 0
      %p120 = por %p118, %p119
      %p121 = scmp.ne.s32.totalorder %s107, %s108
      %p122 = scmp.eq.s32.totalorder %s32, 3
      %p123 = por %p121, %p122
      %p125 = scmp.ne.s32.totalorder %s108, %s124
      %p126 = scmp.eq.s32.totalorder %s32, 0
      %p127 = por %p125, %p126
      %s128 = ssub.s32 %s33, %s45
      %s129 = ssub.s32 %s34, %s41
      %s130 = sor.u32 %s128, %s129
      %p131 = scmp.eq.s32.totalorder %s130, 0
      %s133 = sadd.s32 %s132, 1
      %s134 = scalar_select %p131, %s132, %s133
      %p137 = pneg %p131
      %p138 = scmp.eq.s32.totalorder %s26, 3
      %p139 = por %p137, %p138
      %p140 = scmp.ne.s32.totalorder %s132, %s135
      %p141 = scmp.eq.s32.totalorder %s26, 0
      %p142 = por %p140, %p141
      %p143 = scmp.ne.s32.totalorder %s132, %s135
      %p144 = scmp.eq.s32.totalorder %s31, 3
      %p145 = por %p143, %p144
      %p146 = scmp.ne.s32.totalorder %s135, %s136
      %p147 = scmp.eq.s32.totalorder %s31, 0
      %p148 = por %p146, %p147
      %p149 = scmp.ne.s32.totalorder %s135, %s136
      %p150 = scmp.eq.s32.totalorder %s32, 3
      %p151 = por %p149, %p150
      %p153 = scmp.ne.s32.totalorder %s136, %s152
      %p154 = scmp.eq.s32.totalorder %s32, 0
      %p155 = por %p153, %p154
      %s156 = ssub.s32 %s33, %s45
      %p157 = scmp.eq.s32.totalorder %s156, 0
      %s159 = sadd.s32 %s158, 1
      %s160 = scalar_select %p157, %s158, %s159
      %p163 = pneg %p157
      %p164 = scmp.eq.s32.totalorder %s26, 3
      %p165 = por %p163, %p164
      %p166 = scmp.ne.s32.totalorder %s158, %s161
      %p167 = scmp.eq.s32.totalorder %s26, 0
      %p168 = por %p166, %p167
      %p169 = scmp.ne.s32.totalorder %s158, %s161
      %p170 = scmp.eq.s32.totalorder %s31, 3
      %p171 = por %p169, %p170
      %p172 = scmp.ne.s32.totalorder %s161, %s162
      %p173 = scmp.eq.s32.totalorder %s31, 0
      %p174 = por %p172, %p173
      %p175 = scmp.ne.s32.totalorder %s161, %s162
      %p176 = scmp.eq.s32.totalorder %s32, 3
      %p177 = por %p175, %p176
      %p179 = scmp.ne.s32.totalorder %s162, %s178
      %p180 = scmp.eq.s32.totalorder %s32, 0
      %p181 = por %p179, %p180
      %s182 = ssub.s32 %s33, %s45
      %p183 = scmp.eq.s32.totalorder %s182, 0
      %s185 = sadd.s32 %s184, 1
      %s186 = scalar_select %p183, %s184, %s185
      %p189 = pneg %p183
      %p190 = scmp.eq.s32.totalorder %s26, 3
      %p191 = por %p189, %p190
      %p192 = scmp.ne.s32.totalorder %s184, %s187
      %p193 = scmp.eq.s32.totalorder %s26, 0
      %p194 = por %p192, %p193
      %p195 = scmp.ne.s32.totalorder %s184, %s187
      %p196 = scmp.eq.s32.totalorder %s31, 3
      %p197 = por %p195, %p196
      %p198 = scmp.ne.s32.totalorder %s187, %s188
      %p199 = scmp.eq.s32.totalorder %s31, 0
      %p200 = por %p198, %p199
      %p201 = scmp.ne.s32.totalorder %s187, %s188
      %p202 = scmp.eq.s32.totalorder %s32, 3
      %p203 = por %p201, %p202
      %p205 = scmp.ne.s32.totalorder %s188, %s204
      %p206 = scmp.eq.s32.totalorder %s32, 0
      %p207 = por %p205, %p206
      %s209 = sadd.s32 %s208, 1
      %p212 = scmp.eq.s32.totalorder %s26, 3
      %p213 = scmp.ne.s32.totalorder %s208, %s210
      %p214 = scmp.eq.s32.totalorder %s26, 0
      %p215 = por %p213, %p214
      %p216 = scmp.ne.s32.totalorder %s208, %s210
      %p217 = scmp.eq.s32.totalorder %s31, 3
      %p218 = por %p216, %p217
      %p219 = scmp.ne.s32.totalorder %s210, %s211
      %p220 = scmp.eq.s32.totalorder %s31, 0
      %p221 = por %p219, %p220
      %p222 = scmp.ne.s32.totalorder %s210, %s211
      %p223 = scmp.eq.s32.totalorder %s32, 3
      %p224 = por %p222, %p223
      %p226 = scmp.ne.s32.totalorder %s211, %s225
      %p227 = scmp.eq.s32.totalorder %s32, 0
      %p228 = por %p226, %p227
      %s230 = sadd.s32 %s229, 1
      %p233 = scmp.eq.s32.totalorder %s26, 3
      %p234 = scmp.ne.s32.totalorder %s229, %s231
      %p235 = scmp.eq.s32.totalorder %s26, 0
      %p236 = por %p234, %p235
      %p237 = scmp.ne.s32.totalorder %s229, %s231
      %p238 = scmp.eq.s32.totalorder %s31, 3
      %p239 = por %p237, %p238
      %p240 = scmp.ne.s32.totalorder %s231, %s232
      %p241 = scmp.eq.s32.totalorder %s31, 0
      %p242 = por %p240, %p241
      %p243 = scmp.ne.s32.totalorder %s231, %s232
      %p244 = scmp.eq.s32.totalorder %s32, 3
      %p245 = por %p243, %p244
      %p247 = scmp.ne.s32.totalorder %s232, %s246
      %p248 = scmp.eq.s32.totalorder %s32, 0
      %p249 = por %p247, %p248
      %s251 = sadd.s32 %s250, 1
      %p254 = scmp.eq.s32.totalorder %s26, 3
      %p255 = scmp.ne.s32.totalorder %s250, %s252
      %p256 = scmp.eq.s32.totalorder %s26, 0
      %p257 = por %p255, %p256
      %p258 = scmp.ne.s32.totalorder %s250, %s252
      %p259 = scmp.eq.s32.totalorder %s31, 3
      %p260 = por %p258, %p259
      %p261 = scmp.ne.s32.totalorder %s252, %s253
      %p262 = scmp.eq.s32.totalorder %s31, 0
      %p263 = por %p261, %p262
      %p264 = scmp.ne.s32.totalorder %s252, %s253
      %p265 = scmp.eq.s32.totalorder %s32, 3
      %p266 = por %p264, %p265
      %p268 = scmp.ne.s32.totalorder %s253, %s267
      %p269 = scmp.eq.s32.totalorder %s32, 0
      %p270 = por %p268, %p269
      %s272 = sadd.s32 %s271, 1
      %p275 = scmp.eq.s32.totalorder %s26, 3
      %p276 = scmp.ne.s32.totalorder %s271, %s273
      %p277 = scmp.eq.s32.totalorder %s26, 0
      %p278 = por %p276, %p277
      %p279 = scmp.ne.s32.totalorder %s271, %s273
      %p280 = scmp.eq.s32.totalorder %s31, 3
      %p281 = por %p279, %p280
      %p282 = scmp.ne.s32.totalorder %s273, %s274
      %p283 = scmp.eq.s32.totalorder %s31, 0
      %p284 = por %p282, %p283
      %p285 = scmp.ne.s32.totalorder %s273, %s274
      %p286 = scmp.eq.s32.totalorder %s32, 3
      %p287 = por %p285, %p286
      %p289 = scmp.ne.s32.totalorder %s274, %s288
      %p290 = scmp.eq.s32.totalorder %s32, 0
      %p291 = por %p289, %p290
      %s292 = ssub.s32 %s33, %s45
      %p293 = scmp.eq.s32.totalorder %s292, 0
      %s295 = sadd.s32 %s294, 1
      %s296 = scalar_select %p293, %s294, %s295
      %p299 = pneg %p293
      %p300 = scmp.eq.s32.totalorder %s26, 3
      %p301 = por %p299, %p300
      %p302 = scmp.ne.s32.totalorder %s294, %s297
      %p303 = scmp.eq.s32.totalorder %s26, 0
      %p304 = por %p302, %p303
      %p305 = scmp.ne.s32.totalorder %s294, %s297
      %p306 = scmp.eq.s32.totalorder %s31, 3
      %p307 = por %p305, %p306
      %p308 = scmp.ne.s32.totalorder %s297, %s298
      %p309 = scmp.eq.s32.totalorder %s31, 0
      %p310 = por %p308, %p309
      %p311 = scmp.ne.s32.totalorder %s297, %s298
      %p312 = scmp.eq.s32.totalorder %s32, 3
      %p313 = por %p311, %p312
      %p315 = scmp.ne.s32.totalorder %s298, %s314
      %p316 = scmp.eq.s32.totalorder %s32, 0
      %p317 = por %p315, %p316
      %s318 = ssub.s32 %s33, %s45
      %s319 = ssub.s32 %s34, %s41
      %s320 = sor.u32 %s318, %s319
      %p321 = scmp.eq.s32.totalorder %s320, 0
      %s323 = sadd.s32 %s322, 1
      %s324 = scalar_select %p321, %s322, %s323
      %p327 = pneg %p321
      %p328 = scmp.eq.s32.totalorder %s26, 3
      %p329 = por %p327, %p328
      %p330 = scmp.ne.s32.totalorder %s322, %s325
      %p331 = scmp.eq.s32.totalorder %s26, 0
      %p332 = por %p330, %p331
      %p333 = scmp.ne.s32.totalorder %s322, %s325
      %p334 = scmp.eq.s32.totalorder %s31, 3
      %p335 = por %p333, %p334
      %p336 = scmp.ne.s32.totalorder %s325, %s326
      %p337 = scmp.eq.s32.totalorder %s31, 0
      %p338 = por %p336, %p337
      %p339 = scmp.ne.s32.totalorder %s325, %s326
      %p340 = scmp.eq.s32.totalorder %s32, 3
      %p341 = por %p339, %p340
      %p343 = scmp.ne.s32.totalorder %s326, %s342
      %p344 = scmp.eq.s32.totalorder %s32, 0
      %p345 = por %p343, %p344
      %p346 = scmp.le.s32.totalorder 1, %s26
      %p347 = scmp.lt.s32.totalorder %s26, 5
      %p348 = pnand %p346, %p347
      %p349 = pneg %p348
      // Predicated region
      $region9: #{tpu_custom_call.1} parent=5 // pred_check
        _
      $region10: #{tpu_custom_call.1} parent=5 // pred_check_branch
        %351 = sbr.rel (%p348) target = $region12
      $region11: #{tpu_custom_call.1} parent=5 // pred_region
        %s352 = ssub.s32 %s26, 1
        // Predicated region
        $region13: #{tpu_custom_call.1} parent=11 // pred_check
          %p353 = pneg %p221
        $region14: #{tpu_custom_call.1} parent=11 // pred_check_branch
          %355 = sbr.rel (%p353) target = $region16
        $region15: #{tpu_custom_call.1} parent=11 // pred_region
          %357 = vsyncadd [#allocation6], 0
          %s358 = sshll.u32 %s6, 4
          %s359 = int_to_ptr.hbm [resolvable:$true] %s358
          %s360 = sshll.u32 [#allocation5], 4
          %s361 = int_to_ptr.vmem [resolvable:$true] %s360
          %366 = dma.hbm_to_vmem [thread:$0]  %s359, 1024, %s361, [#allocation6], 64, 64, 4
        $region16: #{tpu_custom_call.1} parent=11 // pred_fallthru
          _
        // Predicated region
        $region17: #{tpu_custom_call.1} parent=11 // pred_check
          %p367 = pneg %p242
        $region18: #{tpu_custom_call.1} parent=11 // pred_check_branch
          %369 = sbr.rel (%p367) target = $region20
        $region19: #{tpu_custom_call.1} parent=11 // pred_region
          _
        $region20: #{tpu_custom_call.1} parent=11 // pred_fallthru
          _
        // Predicated region
        $region21: #{tpu_custom_call.1} parent=11 // pred_check
          %p370 = pneg %p263
        $region22: #{tpu_custom_call.1} parent=11 // pred_check_branch
          %372 = sbr.rel (%p370) target = $region24
        $region23: #{tpu_custom_call.1} parent=11 // pred_region
          %374 = vsyncadd [#allocation9], 0
          %s375 = sshll.u32 %s8, 4
          %s376 = int_to_ptr.hbm [resolvable:$true] %s375
          %s377 = sshll.u32 [#allocation8], 4
          %s378 = int_to_ptr.vmem [resolvable:$true] %s377
          %383 = dma.hbm_to_vmem [thread:$0]  %s376, 1024, %s378, [#allocation9], 64, 64, 4
        $region24: #{tpu_custom_call.1} parent=11 // pred_fallthru
          _
        // Predicated region
        $region25: #{tpu_custom_call.1} parent=11 // pred_check
          %p384 = pneg %p284
        $region26: #{tpu_custom_call.1} parent=11 // pred_check_branch
          %386 = sbr.rel (%p384) target = $region28
        $region27: #{tpu_custom_call.1} parent=11 // pred_region
          _
        $region28: #{tpu_custom_call.1} parent=11 // pred_fallthru
          _
      $region12: #{tpu_custom_call.1} parent=5 // pred_fallthru
        _
      %p387 = scmp.lt.s32.totalorder %s26, 4
      // Predicated region
      $region29: #{tpu_custom_call.1} parent=5 // pred_check
        %p388 = pneg %p387
      $region30: #{tpu_custom_call.1} parent=5 // pred_check_branch
        %390 = sbr.rel (%p388) target = $region32
      $region31: #{tpu_custom_call.1} parent=5 // pred_region
        // Predicated region
        $region33: #{tpu_custom_call.1} parent=31 // pred_check
          %p391 = pneg %p60
        $region34: #{tpu_custom_call.1} parent=31 // pred_check_branch
          %393 = sbr.rel (%p391) target = $region36
        $region35: #{tpu_custom_call.1} parent=31 // pred_region
          %p394 = scmp.lt.s32.totalorder %s33, 1
          %s395 = scalar_select %p394, %s33, 1
          %p396 = scmp.lt.s32.totalorder %s34, 1
          %s397 = scalar_select %p396, %s34, 1
          %s398 = smul.addr %s395, 2
          %s399 = sadd.s32 %s397, %s398
          %s400 = smul.addr %s399, 4
          %s401 = scalar_lea.vmem %s0, %s400
        $region36: #{tpu_custom_call.1} parent=31 // pred_fallthru
          _
        // Predicated region
        $region37: #{tpu_custom_call.1} parent=31 // pred_check
          %p402 = pneg %p86
        $region38: #{tpu_custom_call.1} parent=31 // pred_check_branch
          %404 = sbr.rel (%p402) target = $region40
        $region39: #{tpu_custom_call.1} parent=31 // pred_region
          %p405 = scmp.lt.s32.totalorder %s33, 1
          %s406 = scalar_select %p405, %s33, 1
          %s407 = smul.addr %s406, 4
          %s408 = scalar_lea.vmem %s1, %s407
        $region40: #{tpu_custom_call.1} parent=31 // pred_fallthru
          _
        // Predicated region
        $region41: #{tpu_custom_call.1} parent=31 // pred_check
          %p409 = pneg %p114
        $region42: #{tpu_custom_call.1} parent=31 // pred_check_branch
          %411 = sbr.rel (%p409) target = $region44
        $region43: #{tpu_custom_call.1} parent=31 // pred_region
          %p412 = scmp.lt.s32.totalorder %s33, 1
          %s413 = scalar_select %p412, %s33, 1
          %p414 = scmp.lt.s32.totalorder %s34, 1
          %s415 = scalar_select %p414, %s34, 1
          %s416 = smul.addr %s413, 2
          %s417 = sadd.s32 %s415, %s416
          %s418 = smul.addr %s417, 8
          %s419 = scalar_lea.vmem %s2, %s418
        $region44: #{tpu_custom_call.1} parent=31 // pred_fallthru
          _
        // Predicated region
        $region45: #{tpu_custom_call.1} parent=31 // pred_check
          %p420 = pneg %p142
        $region46: #{tpu_custom_call.1} parent=31 // pred_check_branch
          %422 = sbr.rel (%p420) target = $region48
        $region47: #{tpu_custom_call.1} parent=31 // pred_region
          %p423 = scmp.lt.s32.totalorder %s33, 1
          %s424 = scalar_select %p423, %s33, 1
          %p425 = scmp.lt.s32.totalorder %s34, 1
          %s426 = scalar_select %p425, %s34, 1
          %s427 = smul.addr %s424, 2
          %s428 = sadd.s32 %s426, %s427
          %s429 = scalar_lea.vmem %s3, %s428
        $region48: #{tpu_custom_call.1} parent=31 // pred_fallthru
          _
        // Predicated region
        $region49: #{tpu_custom_call.1} parent=31 // pred_check
          %p430 = pneg %p168
        $region50: #{tpu_custom_call.1} parent=31 // pred_check_branch
          %432 = sbr.rel (%p430) target = $region52
        $region51: #{tpu_custom_call.1} parent=31 // pred_region
          %p433 = scmp.lt.s32.totalorder %s33, 1
          %s434 = scalar_select %p433, %s33, 1
          %s435 = smul.addr %s434, 8
          %s436 = scalar_lea.vmem %s4, %s435
        $region52: #{tpu_custom_call.1} parent=31 // pred_fallthru
          _
        // Predicated region
        $region53: #{tpu_custom_call.1} parent=31 // pred_check
          %p437 = pneg %p194
        $region54: #{tpu_custom_call.1} parent=31 // pred_check_branch
          %439 = sbr.rel (%p437) target = $region56
        $region55: #{tpu_custom_call.1} parent=31 // pred_region
          %p440 = scmp.lt.s32.totalorder %s33, 1
          %s441 = scalar_select %p440, %s33, 1
          %s442 = scalar_lea.vmem %s5, %s441
        $region56: #{tpu_custom_call.1} parent=31 // pred_fallthru
          _
      $region32: #{tpu_custom_call.1} parent=5 // pred_fallthru
        _
      %p443 = scmp.le.s32.totalorder 1, %s26
      %p444 = scmp.lt.s32.totalorder %s26, 5
      %p445 = pnand %p443, %p444
      %p446 = pneg %p445
      // Predicated region
      $region57: #{tpu_custom_call.1} parent=5 // pred_check
        _
      $region58: #{tpu_custom_call.1} parent=5 // pred_check_branch
        %448 = sbr.rel (%p445) target = $region60
      $region59: #{tpu_custom_call.1} parent=5 // pred_region
        %s449 = ssub.s32 %s26, 1
        // Predicated region
        $region61: #{tpu_custom_call.1} parent=59 // pred_check
          %p450 = pneg %p221
        $region62: #{tpu_custom_call.1} parent=59 // pred_check_branch
          %452 = sbr.rel (%p450) target = $region64
        $region63: #{tpu_custom_call.1} parent=59 // pred_region
          %454 = dma.done [#allocation6], 1024
        $region64: #{tpu_custom_call.1} parent=59 // pred_fallthru
          _
        // Predicated region
        $region65: #{tpu_custom_call.1} parent=59 // pred_check
          %p455 = pneg %p263
        $region66: #{tpu_custom_call.1} parent=59 // pred_check_branch
          %457 = sbr.rel (%p455) target = $region68
        $region67: #{tpu_custom_call.1} parent=59 // pred_region
          %459 = dma.done [#allocation9], 1024
        $region68: #{tpu_custom_call.1} parent=59 // pred_fallthru
          _
        %p460 = scmp.lt.s32.totalorder %s35, 1
        %s461 = scalar_select %p460, %s35, 1
        %p462 = scmp.lt.s32.totalorder %s36, 1
        %s463 = scalar_select %p462, %s36, 1
        %s464 = smul.addr %s461, 2
        %s465 = sadd.s32 %s463, %s464
        %s466 = smul.addr %s465, 4
        %s467 = scalar_lea.vmem %s0, %s466
        %p468 = pneg %p66
        %p469 = pneg %p63
        %p470 = scmp.lt.s32.totalorder %s35, 1
        %s471 = scalar_select %p470, %s35, 1
        %s472 = smul.addr %s471, 4
        %s473 = scalar_lea.vmem %s1, %s472
        %p474 = pneg %p92
        %p475 = pneg %p89
        %p476 = scmp.lt.s32.totalorder %s35, 1
        %s477 = scalar_select %p476, %s35, 1
        %p478 = scmp.lt.s32.totalorder %s36, 1
        %s479 = scalar_select %p478, %s36, 1
        %s480 = smul.addr %s477, 2
        %s481 = sadd.s32 %s479, %s480
        %s482 = smul.addr %s481, 8
        %s483 = scalar_lea.vmem %s2, %s482
        %p484 = pneg %p120
        %p485 = pneg %p117
        %p486 = scmp.lt.s32.totalorder %s35, 1
        %s487 = scalar_select %p486, %s35, 1
        %p488 = scmp.lt.s32.totalorder %s36, 1
        %s489 = scalar_select %p488, %s36, 1
        %s490 = smul.addr %s487, 2
        %s491 = sadd.s32 %s489, %s490
        %s492 = scalar_lea.vmem %s3, %s491
        %p493 = pneg %p148
        %p494 = pneg %p145
        %p495 = scmp.lt.s32.totalorder %s35, 1
        %s496 = scalar_select %p495, %s35, 1
        %s497 = smul.addr %s496, 8
        %s498 = scalar_lea.vmem %s4, %s497
        %p499 = pneg %p174
        %p500 = pneg %p171
        %p501 = scmp.lt.s32.totalorder %s35, 1
        %s502 = scalar_select %p501, %s35, 1
        %s503 = scalar_lea.vmem %s5, %s502
        %p504 = pneg %p200
        %p505 = pneg %p197
        %p506 = pneg %p221
        %p507 = pneg %p218
        %p508 = pneg %p242
        %p509 = pneg %p239
        %p510 = pneg %p263
        %p511 = pneg %p260
        %p512 = pneg %p284
        %p513 = pneg %p281
        %p514 = pneg %p310
        %p515 = pneg %p307
        %s516 = sand.u32 %s297, 1
        %s517 = scalar_lea.sflag [#allocation7], %s516
        %s518 = sand.u32 %s297, 1
        %s519 = smul.addr %s518, 8
        %s520 = scalar_lea.vmem [#allocation10], %s519
        %p521 = pneg %p338
        %p522 = pneg %p335
        %s523 = sand.u32 %s325, 1
        %s524 = scalar_lea.sflag [#allocation12], %s523
        %s525 = sand.u32 %s325, 1
        %s526 = smul.addr %s525, 8
        %s527 = scalar_lea.vmem [#allocation11], %s526
        %p528 = scmp.lt.s32.totalorder %s35, 1
        %s529 = scalar_select %p528, %s35, 1
        %p530 = scmp.lt.s32.totalorder %s36, 1
        %s531 = scalar_select %p530, %s36, 1
        %s532 = smul.addr %s529, 2
        %s533 = sadd.s32 %s531, %s532
        %s534 = smul.addr %s533, 4
        %s535 = scalar_lea.vmem %s0, %s534
        %p536 = scmp.lt.s32.totalorder %s35, 1
        %s537 = scalar_select %p536, %s35, 1
        %s538 = smul.addr %s537, 4
        %s539 = scalar_lea.vmem %s1, %s538
        %p540 = scmp.lt.s32.totalorder %s35, 1
        %s541 = scalar_select %p540, %s35, 1
        %p542 = scmp.lt.s32.totalorder %s36, 1
        %s543 = scalar_select %p542, %s36, 1
        %s544 = smul.addr %s541, 2
        %s545 = sadd.s32 %s543, %s544
        %s546 = smul.addr %s545, 8
        %s547 = scalar_lea.vmem %s2, %s546
        %p548 = scmp.lt.s32.totalorder %s35, 1
        %s549 = scalar_select %p548, %s35, 1
        %p550 = scmp.lt.s32.totalorder %s36, 1
        %s551 = scalar_select %p550, %s36, 1
        %s552 = smul.addr %s549, 2
        %s553 = sadd.s32 %s551, %s552
        %s554 = scalar_lea.vmem %s3, %s553
        %p555 = scmp.lt.s32.totalorder %s35, 1
        %s556 = scalar_select %p555, %s35, 1
        %s557 = smul.addr %s556, 8
        %s558 = scalar_lea.vmem %s4, %s557
        %p559 = scmp.lt.s32.totalorder %s35, 1
        %s560 = scalar_select %p559, %s35, 1
        %s561 = scalar_lea.vmem %s5, %s560
        %p563 = scmp.eq.s32.totalorder %s36, 0
        // Predicated region
        $region69: #{tpu_custom_call.1} parent=59 // pred_check
          %p564 = pneg %p563
        $region70: #{tpu_custom_call.1} parent=59 // pred_check_branch
          %566 = sbr.rel (%p564) target = $region72
        $region71: #{tpu_custom_call.1} parent=59 // pred_region
          %v567 = vld [vmem:[%s539] sm:$0xf]
          %v568 = vld [vmem:[#allocation8] sm:$0xf]
          %v569 = vld [vmem:[#allocation8 + $0x4] sm:$0xf]
          %v570 = vld [vmem:[#allocation8 + $0x8] sm:$0xf]
          %v571 = vld [vmem:[#allocation8 + $0xc] sm:$0xf]
          %v572 = vld [vmem:[#allocation8 + $0x10] sm:$0xf]
          %v573 = vld [vmem:[#allocation8 + $0x14] sm:$0xf]
          %v574 = vld [vmem:[#allocation8 + $0x18] sm:$0xf]
          %v575 = vld [vmem:[#allocation8 + $0x1c] sm:$0xf]
          %v576 = vld [vmem:[#allocation8 + $0x20] sm:$0xf]
          %v577 = vld [vmem:[#allocation8 + $0x24] sm:$0xf]
          %v578 = vld [vmem:[#allocation8 + $0x28] sm:$0xf]
          %v579 = vld [vmem:[#allocation8 + $0x2c] sm:$0xf]
          %v580 = vld [vmem:[#allocation8 + $0x30] sm:$0xf]
          %v581 = vld [vmem:[#allocation8 + $0x34] sm:$0xf]
          %v582 = vld [vmem:[#allocation8 + $0x38] sm:$0xf]
          %v583 = vld [vmem:[#allocation8 + $0x3c] sm:$0xf]
          %v584 = vld [vmem:[%s9] sm:$0x1]
          %v586 = vperm.slane %v584, 0
          %v604 = vunpack.c.l.b16 %v568
          %v605 = vunpack.c.l.b16 %v569
          %v606 = vunpack.c.l.b16 %v570
          %v607 = vunpack.c.l.b16 %v571
          %v608 = vunpack.c.l.b16 %v572
          %v609 = vunpack.c.l.b16 %v573
          %v610 = vunpack.c.l.b16 %v574
          %v611 = vunpack.c.l.b16 %v575
          %v612 = vunpack.c.l.b16 %v576
          %v613 = vunpack.c.l.b16 %v577
          %v614 = vunpack.c.l.b16 %v578
          %v615 = vunpack.c.l.b16 %v579
          %v616 = vunpack.c.l.b16 %v580
          %v617 = vunpack.c.l.b16 %v581
          %v618 = vunpack.c.l.b16 %v582
          %v619 = vunpack.c.l.b16 %v583
          %v620 = vpack.c.b16 %v605, %v604
          %v621 = vpack.c.b16 %v607, %v606
          %v622 = vpack.c.b16 %v609, %v608
          %v623 = vpack.c.b16 %v611, %v610
          %v624 = vpack.c.b16 %v613, %v612
          %v625 = vpack.c.b16 %v615, %v614
          %v626 = vpack.c.b16 %v617, %v616
          %v627 = vpack.c.b16 %v619, %v618
          %636 = vmatpush.bf16.msra.mxu0 %v627
          %637 = vmatpush.bf16.msra.mxu0 %v626
          %638 = vmatpush.bf16.msra.mxu0 %v625
          %639 = vmatpush.bf16.msra.mxu0 %v624
          %640 = vmatpush.bf16.msra.mxu0 %v623
          %641 = vmatpush.bf16.msra.mxu0 %v622
          %642 = vmatpush.bf16.msra.mxu0 %v621
          %643 = vmatpush.bf16.msra.mxu0 %v620
          %644 = vmatmul.bf16.gmra.mxu0 %v567
          %v645 = vpop.f32.mrf.mxu0
          %v646 = vadd.f32 %v586, %v645
          %v647 = vpop.f32.mrf.mxu0
          %648 = vdwg.mxu0
          %v649 = vmax.f32 %v646, 0.0
          %v650 = vpack.c.bf16 %v649, %v649
          %651 = vst [vmem:[#allocation2] sm:$0xf] %v650
          %vm652 = vcmask 7168
          %653 = vst.msk [vmem:[#allocation3] sm:$0xff] %vm652, -inf
          %654 = vst.msk [vmem:[#allocation4] sm:$0xff] %vm652, 0.0
          %655 = vst [vmem:[%s520] sm:$0xff] 0.0
        $region72: #{tpu_custom_call.1} parent=59 // pred_fallthru
          _
        %v656 = vld [vmem:[%s535] sm:$0xf]
        %v657 = vld [vmem:[#allocation5] sm:$0xf]
        %v658 = vld [vmem:[#allocation5 + $0x4] sm:$0xf]
        %v659 = vld [vmem:[#allocation5 + $0x8] sm:$0xf]
        %v660 = vld [vmem:[#allocation5 + $0xc] sm:$0xf]
        %v661 = vld [vmem:[#allocation5 + $0x10] sm:$0xf]
        %v662 = vld [vmem:[#allocation5 + $0x14] sm:$0xf]
        %v663 = vld [vmem:[#allocation5 + $0x18] sm:$0xf]
        %v664 = vld [vmem:[#allocation5 + $0x1c] sm:$0xf]
        %v665 = vld [vmem:[#allocation5 + $0x20] sm:$0xf]
        %v666 = vld [vmem:[#allocation5 + $0x24] sm:$0xf]
        %v667 = vld [vmem:[#allocation5 + $0x28] sm:$0xf]
        %v668 = vld [vmem:[#allocation5 + $0x2c] sm:$0xf]
        %v669 = vld [vmem:[#allocation5 + $0x30] sm:$0xf]
        %v670 = vld [vmem:[#allocation5 + $0x34] sm:$0xf]
        %v671 = vld [vmem:[#allocation5 + $0x38] sm:$0xf]
        %v672 = vld [vmem:[#allocation5 + $0x3c] sm:$0xf]
        %v673 = vld [vmem:[%s7] sm:$0x1]
        %v675 = vperm.slane %v673, 0
        %v693 = vunpack.c.l.b16 %v657
        %v694 = vunpack.c.l.b16 %v658
        %v695 = vunpack.c.l.b16 %v659
        %v696 = vunpack.c.l.b16 %v660
        %v697 = vunpack.c.l.b16 %v661
        %v698 = vunpack.c.l.b16 %v662
        %v699 = vunpack.c.l.b16 %v663
        %v700 = vunpack.c.l.b16 %v664
        %v701 = vunpack.c.l.b16 %v665
        %v702 = vunpack.c.l.b16 %v666
        %v703 = vunpack.c.l.b16 %v667
        %v704 = vunpack.c.l.b16 %v668
        %v705 = vunpack.c.l.b16 %v669
        %v706 = vunpack.c.l.b16 %v670
        %v707 = vunpack.c.l.b16 %v671
        %v708 = vunpack.c.l.b16 %v672
        %v709 = vpack.c.b16 %v694, %v693
        %v710 = vpack.c.b16 %v696, %v695
        %v711 = vpack.c.b16 %v698, %v697
        %v712 = vpack.c.b16 %v700, %v699
        %v713 = vpack.c.b16 %v702, %v701
        %v714 = vpack.c.b16 %v704, %v703
        %v715 = vpack.c.b16 %v706, %v705
        %v716 = vpack.c.b16 %v708, %v707
        %725 = vmatpush.bf16.msra.mxu0 %v716
        %726 = vmatpush.bf16.msra.mxu0 %v715
        %727 = vmatpush.bf16.msra.mxu0 %v714
        %728 = vmatpush.bf16.msra.mxu0 %v713
        %729 = vmatpush.bf16.msra.mxu0 %v712
        %730 = vmatpush.bf16.msra.mxu0 %v711
        %731 = vmatpush.bf16.msra.mxu0 %v710
        %732 = vmatpush.bf16.msra.mxu0 %v709
        %733 = vmatmul.bf16.gmra.mxu0 %v656
        %v734 = vpop.f32.mrf.mxu0
        %v735 = vadd.f32 %v675, %v734
        %v736 = vpop.f32.mrf.mxu0
        %737 = vdwg.mxu0
        %v738 = vmax.f32 %v735, 0.0
        %v739 = vmul.f32 %v738, 0.25
        %v740 = vpack.c.bf16 %v739, %v739
        %v741 = vld [vmem:[#allocation2] sm:$0xf]
        %742 = vmatpush.bf16.xpose.msra.mxu0 0
        %743 = vmatpush.bf16.xpose.msra.mxu0 0
        %744 = vmatpush.bf16.xpose.msra.mxu0 0
        %745 = vmatpush.bf16.xpose.msra.mxu0 0
        %746 = vmatpush.bf16.xpose.msra.mxu0 0
        %747 = vmatpush.bf16.xpose.msra.mxu0 0
        %748 = vmatpush.bf16.xpose.msra.mxu0 0
        %749 = vmatpush.bf16.xpose.msra.mxu0 %v741
        %750 = vmatmul.bf16.gmra.mxu0 %v740
        %v751 = vpop.f32.mrf.mxu0
        %v752 = vadd.f32 0.0, %v751
        %v753 = vpop.f32.mrf.mxu0
        %754 = vdwg.mxu0
        %v755 = vld [vmem:[%s547] sm:$0xff]
        %v756 = vld [vmem:[%s561] sm:$0x1]
        %758 = vset.pattern.permute.xlu0 0
        %759 = vperm.xlu0 %758, %v755
        %v760 = vpop.permute.xlu0 %759
        %v763 = vperm.slane %v756, 0
        %v765 = vmul.f32 %v760, %v763
        %vm766 = vcmp.gt.f32.partialorder %v765, 0.0
        %v767 = vsel %vm766, %v752, -1e+09
        %vm768 = vcmask 64512
        %v769 = vsel %vm768, %v767, -inf
        %770 = vmax.xlane.f32.xlu0 %v769
        %v771 = vpop.xlane.xlu0 %770
        %v772 = vsub.f32 %v767, %v771
        %v773 = vmul.f32 %v772, 1.442695
        %v774 = vpow.pop %v773
        %v775 = vsel %vm768, %v774, 0.0
        %776 = vadd.xlane.f32.xlu0 %v775
        %v777 = vpop.xlane.xlu0 %776
        %v778 = vrcp.pop %v777
        %v779 = vmul.f32 %v774, %v778
        %v780 = vpack.c.bf16 %v779, %v779
        %v781 = vld [vmem:[%s539] sm:$0xf]
        %v783 = vsel %vm768, %v780, 0
        %vm785 = vcmask 1043456
        %v787 = vsel %vm785, %v781, 0
        %789 = vmatpush.bf16.msra.mxu0 0
        %790 = vmatpush.bf16.msra.mxu0 0
        %791 = vmatpush.bf16.msra.mxu0 0
        %792 = vmatpush.bf16.msra.mxu0 0
        %793 = vmatpush.bf16.msra.mxu0 0
        %794 = vmatpush.bf16.msra.mxu0 0
        %795 = vmatpush.bf16.msra.mxu0 0
        %796 = vmatpush.bf16.msra.mxu0 %v787
        %797 = vmatmul.bf16.gmra.mxu0 %v783
        %v798 = vpop.f32.mrf.mxu0
        %v799 = vadd.f32 0.0, %v798
        %v800 = vpop.f32.mrf.mxu0
        %801 = vdwg.mxu0
        %802 = vst [vmem:[%s527] sm:$0xff] %v799
        %803 = vmatpush.bf16.xpose.msra.mxu0 0
        %804 = vmatpush.bf16.xpose.msra.mxu0 0
        %805 = vmatpush.bf16.xpose.msra.mxu0 0
        %806 = vmatpush.bf16.xpose.msra.mxu0 0
        %807 = vmatpush.bf16.xpose.msra.mxu0 0
        %808 = vmatpush.bf16.xpose.msra.mxu0 0
        %809 = vmatpush.bf16.xpose.msra.mxu0 0
        %810 = vmatpush.bf16.xpose.msra.mxu0 %v740
        %811 = vmatmul.bf16.gmra.mxu0 %v741
        %v812 = vpop.f32.mrf.mxu0
        %v813 = vadd.f32 0.0, %v812
        %v814 = vpop.f32.mrf.mxu0
        %815 = vdwg.mxu0
        %v816 = vld [vmem:[%s558] sm:$0xff]
        %v817 = vld [vmem:[%s554] sm:$0x1]
        %819 = vset.pattern.permute.xlu0 0
        %820 = vperm.xlu0 %819, %v816
        %v821 = vpop.permute.xlu0 %820
        %v824 = vperm.slane %v817, 0
        %v826 = vmul.f32 %v821, %v824
        %vm827 = vcmp.gt.f32.partialorder %v826, 0.0
        %v828 = vsel %vm827, %v813, -1e+09
        %v829 = vld [vmem:[#allocation3] sm:$0xff]
        %v830 = vsel %vm768, %v828, -inf
        %831 = vmax.xlane.f32.xlu0 %v830
        %v832 = vpop.xlane.xlu0 %831
        %v833 = vmax.f32 %v829, %v832
        %v834 = vsub.f32 %v829, %v833
        %v835 = vmul.f32 %v834, 1.442695
        %v836 = vpow.pop %v835
        %838 = vset.pattern.permute.xlu0 0
        %839 = vperm.xlu0 %838, %v833
        %v840 = vpop.permute.xlu0 %839
        %v842 = vsub.f32 %v828, %v840
        %v843 = vmul.f32 %v842, 1.442695
        %v844 = vpow.pop %v843
        %v845 = vld [vmem:[#allocation4] sm:$0xff]
        %v846 = vmul.f32 %v836, %v845
        %v847 = vsel %vm768, %v844, 0.0
        %848 = vadd.xlane.f32.xlu0 %v847
        %v849 = vpop.xlane.xlu0 %848
        %v850 = vadd.f32 %v846, %v849
        %vm851 = vcmask 7168
        %852 = vst.msk [vmem:[#allocation4] sm:$0xff] %vm851, %v850
        %v853 = vld [vmem:[%s520] sm:$0xff]
        %855 = vset.pattern.permute.xlu0 0
        %856 = vperm.xlu0 %855, %v836
        %v857 = vpop.permute.xlu0 %856
        %v859 = vmul.f32 %v857, %v853
        %v860 = vpack.c.bf16 %v844, %v844
        %v862 = vsel %vm768, %v860, 0
        %v865 = vsel %vm785, %v656, 0
        %867 = vmatpush.bf16.msra.mxu0 0
        %868 = vmatpush.bf16.msra.mxu0 0
        %869 = vmatpush.bf16.msra.mxu0 0
        %870 = vmatpush.bf16.msra.mxu0 0
        %871 = vmatpush.bf16.msra.mxu0 0
        %872 = vmatpush.bf16.msra.mxu0 0
        %873 = vmatpush.bf16.msra.mxu0 0
        %874 = vmatpush.bf16.msra.mxu0 %v865
        %875 = vmatmul.bf16.gmra.mxu0 %v862
        %v876 = vpop.f32.mrf.mxu0
        %v877 = vadd.f32 0.0, %v876
        %v878 = vpop.f32.mrf.mxu0
        %879 = vdwg.mxu0
        %v880 = vadd.f32 %v859, %v877
        %881 = vst [vmem:[%s520] sm:$0xff] %v880
        %882 = vst.msk [vmem:[#allocation3] sm:$0xff] %vm851, %v833
        %p883 = scmp.eq.s32.totalorder %s36, 1
        // Predicated region
        $region73: #{tpu_custom_call.1} parent=59 // pred_check
          %p884 = pneg %p883
        $region74: #{tpu_custom_call.1} parent=59 // pred_check_branch
          %886 = sbr.rel (%p884) target = $region76
        $region75: #{tpu_custom_call.1} parent=59 // pred_region
          %v887 = vld [vmem:[%s520] sm:$0xff]
          %v888 = vld [vmem:[#allocation4] sm:$0xff]
          %v889 = vrcp.pop %v888
          %891 = vset.pattern.permute.xlu0 0
          %892 = vperm.xlu0 %891, %v889
          %v893 = vpop.permute.xlu0 %892
          %v895 = vmul.f32 %v887, %v893
          %896 = vst [vmem:[%s520] sm:$0xff] %v895
        $region76: #{tpu_custom_call.1} parent=59 // pred_fallthru
          _
        %s897 = sand.u32 %s297, 1
        %s898 = scalar_lea.sflag [#allocation7], %s897
        %s899 = sand.u32 %s297, 1
        %s900 = smul.addr %s899, 8
        %s901 = scalar_lea.vmem [#allocation10], %s900
        %s902 = sand.u32 %s325, 1
        %s903 = scalar_lea.sflag [#allocation12], %s902
        %s904 = sand.u32 %s325, 1
        %s905 = smul.addr %s904, 8
        %s906 = scalar_lea.vmem [#allocation11], %s905
        // Predicated region
        $region77: #{tpu_custom_call.1} parent=59 // pred_check
          %p907 = pneg %p307
        $region78: #{tpu_custom_call.1} parent=59 // pred_check_branch
          %909 = sbr.rel (%p907) target = $region80
        $region79: #{tpu_custom_call.1} parent=59 // pred_region
          %911 = vsyncadd %s898, 0
          %s912 = smul.addr %s35, 8
          %s913 = scalar_lea.hbm %s10, %s912
          %s915 = sshll.u32 %s901, 4
          %s916 = int_to_ptr.vmem [resolvable:$true] %s915
          %s917 = sshll.u32 %s913, 4
          %s918 = int_to_ptr.hbm [resolvable:$true] %s917
          %920 = dma.vmem_to_hbm [thread:$0]  %s916, 128, %s918, %s898
        $region80: #{tpu_custom_call.1} parent=59 // pred_fallthru
          _
        // Predicated region
        $region81: #{tpu_custom_call.1} parent=59 // pred_check
          %p921 = pneg %p335
        $region82: #{tpu_custom_call.1} parent=59 // pred_check_branch
          %923 = sbr.rel (%p921) target = $region84
        $region83: #{tpu_custom_call.1} parent=59 // pred_region
          %925 = vsyncadd %s903, 0
          %s926 = smul.addr %s35, 2
          %s927 = sadd.s32 %s36, %s926
          %s928 = smul.addr %s927, 8
          %s929 = scalar_lea.hbm %s11, %s928
          %s931 = sshll.u32 %s906, 4
          %s932 = int_to_ptr.vmem [resolvable:$true] %s931
          %s933 = sshll.u32 %s929, 4
          %s934 = int_to_ptr.hbm [resolvable:$true] %s933
          %936 = dma.vmem_to_hbm [thread:$0]  %s932, 128, %s934, %s903
        $region84: #{tpu_custom_call.1} parent=59 // pred_fallthru
          _
      $region60: #{tpu_custom_call.1} parent=5 // pred_fallthru
        _
      %p937 = scmp.le.s32.totalorder 2, %s26
      // Predicated region
      $region85: #{tpu_custom_call.1} parent=5 // pred_check
        %p938 = pneg %p937
      $region86: #{tpu_custom_call.1} parent=5 // pred_check_branch
        %940 = sbr.rel (%p938) target = $region88
      $region87: #{tpu_custom_call.1} parent=5 // pred_region
        %s941 = ssub.s32 %s26, 2
        // Predicated region
        $region89: #{tpu_custom_call.1} parent=87 // pred_check
          %p942 = pneg %p313
        $region90: #{tpu_custom_call.1} parent=87 // pred_check_branch
          %944 = sbr.rel (%p942) target = $region92
        $region91: #{tpu_custom_call.1} parent=87 // pred_region
          %s945 = sand.u32 %s298, 1
          %s946 = scalar_lea.sflag [#allocation7], %s945
          %s947 = sand.u32 %s298, 1
          %s948 = smul.addr %s947, 8
          %s949 = scalar_lea.vmem [#allocation10], %s948
          %951 = dma.done %s946, 128
        $region92: #{tpu_custom_call.1} parent=87 // pred_fallthru
          _
        // Predicated region
        $region93: #{tpu_custom_call.1} parent=87 // pred_check
          %p952 = pneg %p341
        $region94: #{tpu_custom_call.1} parent=87 // pred_check_branch
          %954 = sbr.rel (%p952) target = $region96
        $region95: #{tpu_custom_call.1} parent=87 // pred_region
          %s955 = sand.u32 %s326, 1
          %s956 = scalar_lea.sflag [#allocation12], %s955
          %s957 = sand.u32 %s326, 1
          %s958 = smul.addr %s957, 8
          %s959 = scalar_lea.vmem [#allocation11], %s958
          %961 = dma.done %s956, 128
        $region96: #{tpu_custom_call.1} parent=87 // pred_fallthru
          _
      $region88: #{tpu_custom_call.1} parent=5 // pred_fallthru
        _
    $region6: #{tpu_custom_call.1} parent=1 // loop_footer
      %s30 = sadd.s32 1, %s26
    $region7: #{tpu_custom_call.1} parent=1 // loop_footer_branch
      %25 = sbr.rel target = $region3
    $region8: #{tpu_custom_call.1} parent=1 // loop_exit
      _
    %962 = vsyncpa [#allocation6], 1
    %s963 = scalar_lea.sflag [#allocation6], 1
    %964 = vsyncpa %s963, 1
    %965 = vsyncpa [#allocation9], 1
    %966 = vsyncpa [#allocation7], 1
    %s967 = scalar_lea.sflag [#allocation7], 1
    %968 = vsyncpa %s967, 1
    %969 = vsyncpa [#allocation12], 1
    %s970 = scalar_lea.sflag [#allocation12], 1
    %971 = vsyncpa %s970, 1

</llo_original>
